<compile_context>
chip_gen: v7x
topology: tpu7x:2x2x1
jax: 0.10.0
libtpu: 0.0.40
codegen_flags: <defaults>
</compile_context>

<pallas_src>
import functools

import jax
import jax.numpy as jnp
from jax.experimental import pallas as pl
from jax.experimental.pallas import tpu as pltpu


def _layernorm_f32(x, gamma, beta, eps):
    # Single-pass LayerNorm: E[x], E[x^2] (halves XLU reduction traffic).
    mean = jnp.mean(x, axis=-1, keepdims=True)
    mean2 = jnp.mean(x * x, axis=-1, keepdims=True)
    var = mean2 - mean * mean
    return (x - mean) * jax.lax.rsqrt(var + eps) * gamma + beta


def _const_spec(shape, index_map, single_buffer):
    """BlockSpec for a grid-invariant (constant) operand.

    With single_buffer=True we ask the pipeline not to double-buffer it
    (pl.Buffered(1)); falls back to a plain spec on pallas versions without
    the pipeline_mode kwarg.
    """
    if single_buffer:
        try:
            return pl.BlockSpec(shape, index_map, pipeline_mode=pl.Buffered(1))
        except Exception:
            pass
    return pl.BlockSpec(shape, index_map)


def _vmem_capacity_bytes():
    try:
        return int(pltpu.get_tpu_info().vmem_capacity_bytes)
    except Exception:
        return 64 * 1024 * 1024   # conservative (v7x-sized) fallback


# --------------------------------------------------------------------------
# Stage 1: LayerNorm(x_kv) + fused K|V projection (once per kv tile).
# --------------------------------------------------------------------------
def _kv_proj_kernel(xkv_ref, gkv_ref, bkv_ln_ref, wkv_ref, bkv_ref,
                    k_ref, v_ref,
                    *, num_heads, num_qk_channels, num_v_channels, eps):
    H = num_heads
    hd_qk = num_qk_channels // H
    hd_v = num_v_channels // H

    xkv = xkv_ref[...].astype(jnp.float32)                        # (TK, Dkv)
    xn = _layernorm_f32(xkv, gkv_ref[...], bkv_ln_ref[...], eps)
    kv = jnp.dot(xn.astype(jnp.bfloat16), wkv_ref[...],
                 preferred_element_type=jnp.float32) + bkv_ref[...]
    kv = kv.astype(jnp.bfloat16)                                  # (TK, Cqk+Cv)

    # Head split happens ONCE per kv tile (not per query tile / per ki step).
    for h in range(H):
        k_ref[h] = kv[:, h * hd_qk:(h + 1) * hd_qk]
        v_ref[h] = kv[:, num_qk_channels + h * hd_v:
                      num_qk_channels + (h + 1) * hd_v]


# --------------------------------------------------------------------------
# Stage 2: flash-attention over the precomputed per-head K/V.
# --------------------------------------------------------------------------
def _attention_kernel(xq_ref, gq_ref, bq_ln_ref, wq_ref, bq_ref,
                      k_ref, v_ref, wo_ref, bo_ref,
                      o_ref,
                      q_scr, m_scr, l_scr, acc_scr, o_scr,
                      *, num_heads, hd_qk, hd_v, eps):
    H = num_heads
    ki = pl.program_id(2)
    nk = pl.num_programs(2)

    # ---- ki == 0: LayerNorm + Q projection for this query tile; init acc ----
    @pl.when(ki == 0)
    def _init():
        xq = xq_ref[...].astype(jnp.float32)                      # (TQ, Dq)
        xn = _layernorm_f32(xq, gq_ref[...], bq_ln_ref[...], eps)
        # dp_scale is pre-folded into wq / bq on the host.
        q = jnp.dot(xn.astype(jnp.bfloat16), wq_ref[...],
                    preferred_element_type=jnp.float32) + bq_ref[...]
        qb = q.astype(jnp.bfloat16)                               # (TQ, Cqk)
        for h in range(H):                                        # once per q tile
            q_scr[h] = qb[:, h * hd_qk:(h + 1) * hd_qk]
        m_scr[...] = jnp.full(m_scr.shape, -jnp.inf, dtype=jnp.float32)
        l_scr[...] = jnp.zeros(l_scr.shape, dtype=jnp.float32)
        acc_scr[...] = jnp.zeros(acc_scr.shape, dtype=jnp.float32)

    # ---- every ki: per-head online-softmax update ----------------------------
    def _head_step(h, carry):
        kh = k_ref[h]                                             # (TK, hd_qk) bf16
        vh = v_ref[h]                                             # (TK, hd_v)  bf16
        s = jax.lax.dot_general(
            q_scr[h], kh,
            dimension_numbers=(((1,), (1,)), ((), ())),
            preferred_element_type=jnp.float32)                   # (TQ, TK)
        m_prev = m_scr[h]                                         # (TQ, 1)
        m_new = jnp.maximum(m_prev, jnp.max(s, axis=-1, keepdims=True))
        alpha = jnp.exp(m_prev - m_new)
        p = jnp.exp(s - m_new)                                    # f32 exp (v5e-safe)
        l_scr[h] = alpha * l_scr[h] + jnp.sum(p, axis=-1, keepdims=True)
        acc_scr[h] = alpha * acc_scr[h] + jnp.dot(
            p.astype(jnp.bfloat16), vh, preferred_element_type=jnp.float32)
        m_scr[h] = m_new
        return carry

    jax.lax.fori_loop(0, H, _head_step, 0)

    # ---- last ki: normalize + ONE full-depth output GEMM ---------------------
    @pl.when(ki == nk - 1)
    def _finalize():
        for h in range(H):
            inv_l = pl.reciprocal(l_scr[h], approx=True)          # (TQ, 1)
            o_scr[:, h * hd_v:(h + 1) * hd_v] = (
                acc_scr[h] * inv_l).astype(jnp.bfloat16)
        out = jnp.dot(o_scr[...], wo_ref[...],
                      preferred_element_type=jnp.float32) + bo_ref[...]
        o_ref[...] = out.astype(o_ref.dtype)


# --------------------------------------------------------------------------
# Wrapper
# --------------------------------------------------------------------------
def cross_attention(x_q, x_kv, params, *, num_heads, eps=1e-5, tq=None, tk=None):
    """Pre-LN cross-attention.  x_q: (B, N, Dq), x_kv: (B, L, Dkv)."""
    B, N, Dq = x_q.shape
    Bk, L, Dkv = x_kv.shape
    assert B == Bk
    Cqk = params["wq"].shape[1]
    Cv = params["wv"].shape[1]
    Dout = params["wo"].shape[1]
    assert Cqk % num_heads == 0 and Cv % num_heads == 0
    hd_qk = Cqk // num_heads
    hd_v = Cv // num_heads
    dp_scale = float(hd_qk ** -0.5)

    vmem_cap = _vmem_capacity_bytes()
    big_vmem = vmem_cap > 96 * 1024 * 1024            # 128 MiB parts (v5e/v6e)
    vmem_limit = min(int(vmem_cap * 3 // 4), 100 * 1024 * 1024)

    # Tile sizes: 128/256-aligned for realistic shapes, full extent when small.
    # Larger TK on 128-MiB parts (deeper P@V contraction, fewer grid steps).
    # NOTE(v7x): keep B * (N // TQ) >= 2 so both TensorCores get work; if the
    # query axis collapses to one tile, prefer growing TK over TQ.
    TQ = tq if tq is not None else min(N, 256)
    TK = tk if tk is not None else min(L, 512 if big_vmem else 256)
    assert N % TQ == 0 and L % TK == 0, "seq lens must be divisible by tiles"

    # Lane-dense output: pad Dout up to a multiple of 128 (zero weight columns).
    Dout_pad = ((Dout + 127) // 128) * 128
    wo = params["wo"]
    bo = params["bo"]
    if Dout_pad != Dout:
        wo = jnp.pad(wo, ((0, 0), (0, Dout_pad - Dout)))
        bo = jnp.pad(bo, ((0, 0), (0, Dout_pad - Dout)))

    # Host-side weight prep: fold dp_scale into the Q projection, fuse the K|V
    # projections (same input) and pre-cast MXU operands to bf16.
    wq = (params["wq"] * dp_scale).astype(jnp.bfloat16)
    bq = params["bq"] * dp_scale
    wkv = jnp.concatenate([params["wk"], params["wv"]], axis=1).astype(jnp.bfloat16)
    bkv = jnp.concatenate([params["bk"], params["bv"]], axis=1)
    wo = wo.astype(jnp.bfloat16)

    def _run(single_buffer_consts):
        cst = lambda shape, imap: _const_spec(shape, imap, single_buffer_consts)

        # ------------------ stage 1: K/V projection ------------------
        kv_kernel = functools.partial(
            _kv_proj_kernel, num_heads=num_heads, num_qk_channels=Cqk,
            num_v_channels=Cv, eps=eps)
        c2 = lambda b, ki: (0, 0)
        k_heads, v_heads = pl.pallas_call(
            kv_kernel,
            out_shape=(
                jax.ShapeDtypeStruct((B, num_heads, L, hd_qk), jnp.bfloat16),
                jax.ShapeDtypeStruct((B, num_heads, L, hd_v), jnp.bfloat16)),
            grid_spec=pltpu.PrefetchScalarGridSpec(
                num_scalar_prefetch=0,
                grid=(B, L // TK),
                in_specs=[
                    pl.BlockSpec((None, TK, Dkv), lambda b, ki: (b, ki, 0)),  # x_kv
                    cst((1, Dkv), c2),                                        # gamma_kv
                    cst((1, Dkv), c2),                                        # beta_kv
                    cst((Dkv, Cqk + Cv), c2),                                 # wkv (bf16)
                    cst((1, Cqk + Cv), c2),                                   # bkv
                ],
                out_specs=[
                    pl.BlockSpec((None, num_heads, TK, hd_qk),
                                 lambda b, ki: (b, 0, ki, 0)),
                    pl.BlockSpec((None, num_heads, TK, hd_v),
                                 lambda b, ki: (b, 0, ki, 0)),
                ],
            ),
            compiler_params=pltpu.CompilerParams(
                dimension_semantics=("parallel", "parallel"),
                vmem_limit_bytes=vmem_limit),
        )(x_kv, params["gamma_kv"], params["beta_kv"], wkv, bkv)

        # ------------------ stage 2: attention ------------------
        attn_kernel = functools.partial(
            _attention_kernel, num_heads=num_heads, hd_qk=hd_qk, hd_v=hd_v, eps=eps)
        c3 = lambda b, qi, ki: (0, 0)
        out = pl.pallas_call(
            attn_kernel,
            out_shape=jax.ShapeDtypeStruct((B, N, Dout_pad), x_q.dtype),
            grid_spec=pltpu.PrefetchScalarGridSpec(
                num_scalar_prefetch=0,
                grid=(B, N // TQ, L // TK),
                in_specs=[
                    pl.BlockSpec((None, TQ, Dq), lambda b, qi, ki: (b, qi, 0)),  # x_q
                    cst((1, Dq), c3),                                            # gamma_q
                    cst((1, Dq), c3),                                            # beta_q
                    cst((Dq, Cqk), c3),                                          # wq (bf16, *dp_scale)
                    cst((1, Cqk), c3),                                           # bq (*dp_scale)
                    pl.BlockSpec((None, num_heads, TK, hd_qk),
                                 lambda b, qi, ki: (b, 0, ki, 0)),               # k heads
                    pl.BlockSpec((None, num_heads, TK, hd_v),
                                 lambda b, qi, ki: (b, 0, ki, 0)),               # v heads
                    cst((Cv, Dout_pad), c3),                                     # wo (bf16)
                    cst((1, Dout_pad), c3),                                      # bo
                ],
                out_specs=pl.BlockSpec((None, TQ, Dout_pad),
                                       lambda b, qi, ki: (b, qi, 0)),
                scratch_shapes=[
                    pltpu.VMEM((num_heads, TQ, hd_qk), jnp.bfloat16),   # q / head
                    pltpu.VMEM((num_heads, TQ, 1), jnp.float32),        # m
                    pltpu.VMEM((num_heads, TQ, 1), jnp.float32),        # l
                    pltpu.VMEM((num_heads, TQ, hd_v), jnp.float32),     # acc
                    pltpu.VMEM((TQ, Cv), jnp.bfloat16),                 # concat(heads) out
                ],
            ),
            compiler_params=pltpu.CompilerParams(
                dimension_semantics=("parallel", "parallel", "arbitrary"),
                vmem_limit_bytes=vmem_limit),
        )(x_q, params["gamma_q"], params["beta_q"], wq, bq,
          k_heads, v_heads, wo, bo)
        return out

    try:
        out = jax.block_until_ready(_run(True))
    except Exception:
        # Some pallas versions reject single-buffered constant blocks; retry
        # with default double buffering (functionally identical).
        out = jax.block_until_ready(_run(False))

    return out[..., :Dout] if Dout_pad != Dout else out


def cross_attention_ref(x_q, x_kv, params, *, num_heads, eps=1e-5):
    """Pure-JAX (f32) reference mirroring the PyTorch forward."""
    def ln(x, g, b):
        mean = jnp.mean(x, axis=-1, keepdims=True)
        var = jnp.mean((x - mean) ** 2, axis=-1, keepdims=True)
        return (x - mean) / jnp.sqrt(var + eps) * g[0] + b[0]

    xq = ln(x_q, params["gamma_q"], params["beta_q"])
    xkv = ln(x_kv, params["gamma_kv"], params["beta_kv"])
    q = xq @ params["wq"] + params["bq"][0]
    k = xkv @ params["wk"] + params["bk"][0]
    v = xkv @ params["wv"] + params["bv"][0]
    B, N, _ = x_q.shape
    split = lambda t: t.reshape(t.shape[0], t.shape[1], num_heads, -1).transpose(0, 2, 1, 3)
    q, k, v = split(q), split(k), split(v)
    q = q * (q.shape[-1] ** -0.5)
    attn = jnp.einsum("bhic,bhjc->bhij", q, k)
    attn = jax.nn.softmax(attn, axis=-1)
    o = jnp.einsum("bhij,bhjc->bhic", attn, v)
    o = o.transpose(0, 2, 1, 3).reshape(B, N, -1)
    return o @ params["wo"] + params["bo"][0]


if __name__ == "__main__":
    # Small cross-attention shapes consistent with the module:
    #   batch=2, query seq=16, kv seq=24, q channels=32, kv channels=64, heads=4.
    B, N, L = 2, 16, 24
    Dq, Dkv = 32, 64
    num_heads = 4
    Cqk = Dq        # num_qk_channels default = num_q_input_channels
    Cv = Cqk        # num_v_channels default = num_qk_channels
    Dout = Dq       # num_output_channels default = num_q_input_channels

    key = jax.random.PRNGKey(0)
    ks = jax.random.split(key, 8)

    x_q = jax.random.normal(ks[0], (B, N, Dq), dtype=jnp.float32)
    x_kv = jax.random.normal(ks[1], (B, L, Dkv), dtype=jnp.float32)

    # Deterministic parameter init (weights stored pre-transposed as (in, out)).
    def lin(k, fan_in, fan_out):
        s = 1.0 / jnp.sqrt(fan_in)
        kw, kb = jax.random.split(k)
        w = jax.random.uniform(kw, (fan_in, fan_out), jnp.float32, -s, s)
        b = jax.random.uniform(kb, (1, fan_out), jnp.float32, -s, s)
        return w, b

    wq, bq = lin(ks[2], Dq, Cqk)
    wk, bk = lin(ks[3], Dkv, Cqk)
    wv, bv = lin(ks[4], Dkv, Cv)
    wo, bo = lin(ks[5], Cv, Dout)

    params = {
        "gamma_q": jnp.ones((1, Dq), jnp.float32),
        "beta_q": jnp.zeros((1, Dq), jnp.float32),
        "gamma_kv": jnp.ones((1, Dkv), jnp.float32),
        "beta_kv": jnp.zeros((1, Dkv), jnp.float32),
        "wq": wq, "bq": bq,
        "wk": wk, "bk": bk,
        "wv": wv, "bv": bv,
        "wo": wo, "bo": bo,
    }

    # Small tiles so the demo exercises multiple q tiles and kv (reduction) steps.
    out = cross_attention(x_q, x_kv, params, num_heads=num_heads, tq=8, tk=8)
    out = jax.block_until_ready(out)

    ref = cross_attention_ref(x_q, x_kv, params, num_heads=num_heads)
    assert out.shape == (B, N, Dout)
    # bf16 MXU operands (f32 accumulate) + approx reciprocal loosen the tolerance.
    assert jnp.allclose(out, ref, atol=5e-2, rtol=5e-2), "mismatch vs reference"

    print("KERNEL_OK")
</pallas_src>

<mosaic_0001>
module attributes {stable_mosaic.version = 11 : i64} {
  func.func @_kv_proj_kernel(%arg0: i32, %arg1: i32, %arg2: memref<1x8x64xf32, #tpu.memory_space<vmem>>, %arg3: memref<1x64xf32, #tpu.memory_space<vmem>>, %arg4: memref<1x64xf32, #tpu.memory_space<vmem>>, %arg5: memref<64x64xbf16, #tpu.memory_space<vmem>>, %arg6: memref<1x64xf32, #tpu.memory_space<vmem>>, %arg7: memref<1x4x8x8xbf16, #tpu.memory_space<vmem>>, %arg8: memref<1x4x8x8xbf16, #tpu.memory_space<vmem>>) attributes {dimension_semantics = [#tpu.dimension_semantics<parallel>, #tpu.dimension_semantics<parallel>], iteration_bounds = array<i64: 2, 3>, scalar_prefetch = 0 : i64, scratch_operands = 0 : i64, tpu.core_type = #tpu.core_type<tc>, window_params = [{transform_indices = @transform_0, window_bounds = array<i64: 1, 8, 64>}, {pipeline_mode = #tpu.pipeline_mode<synchronous>, transform_indices = @transform_1, window_bounds = array<i64: 1, 64>}, {pipeline_mode = #tpu.pipeline_mode<synchronous>, transform_indices = @transform_2, window_bounds = array<i64: 1, 64>}, {pipeline_mode = #tpu.pipeline_mode<synchronous>, transform_indices = @transform_3, window_bounds = array<i64: 64, 64>}, {pipeline_mode = #tpu.pipeline_mode<synchronous>, transform_indices = @transform_4, window_bounds = array<i64: 1, 64>}, {transform_indices = @transform_5, window_bounds = array<i64: 1, 4, 8, 8>}, {transform_indices = @transform_6, window_bounds = array<i64: 1, 4, 8, 8>}]} {
    %c0 = arith.constant 0 : index
    %c0_0 = arith.constant 0 : index
    %c0_1 = arith.constant 0 : index
    %0 = vector.load %arg2[%c0, %c0_0, %c0_1] : memref<1x8x64xf32, #tpu.memory_space<vmem>>, vector<1x8x64xf32>
    %1 = vector.shape_cast %0 : vector<1x8x64xf32> to vector<8x64xf32>
    %c0_2 = arith.constant 0 : index
    %c0_3 = arith.constant 0 : index
    %2 = vector.load %arg3[%c0_2, %c0_3] : memref<1x64xf32, #tpu.memory_space<vmem>>, vector<1x64xf32>
    %c0_4 = arith.constant 0 : index
    %c0_5 = arith.constant 0 : index
    %3 = vector.load %arg4[%c0_4, %c0_5] : memref<1x64xf32, #tpu.memory_space<vmem>>, vector<1x64xf32>
    %cst = arith.constant dense<0.000000e+00> : vector<8xf32>
    %4 = vector.multi_reduction <add>, %1, %cst [1] : vector<8x64xf32> to vector<8xf32>
    %5 = vector.shape_cast %4 : vector<8xf32> to vector<8x1xf32>
    %cst_6 = arith.constant 6.400000e+01 : f32
    %6 = vector.broadcast %cst_6 : f32 to vector<8x1xf32>
    %7 = arith.divf %5, %6 : vector<8x1xf32>
    %8 = arith.mulf %1, %1 : vector<8x64xf32>
    %cst_7 = arith.constant dense<0.000000e+00> : vector<8xf32>
    %9 = vector.multi_reduction <add>, %8, %cst_7 [1] : vector<8x64xf32> to vector<8xf32>
    %10 = vector.shape_cast %9 : vector<8xf32> to vector<8x1xf32>
    %cst_8 = arith.constant 6.400000e+01 : f32
    %11 = vector.broadcast %cst_8 : f32 to vector<8x1xf32>
    %12 = arith.divf %10, %11 : vector<8x1xf32>
    %13 = arith.mulf %7, %7 : vector<8x1xf32>
    %14 = arith.subf %12, %13 : vector<8x1xf32>
    %15 = vector.broadcast %7 : vector<8x1xf32> to vector<8x64xf32>
    %16 = arith.subf %1, %15 : vector<8x64xf32>
    %cst_9 = arith.constant 9.99999974E-6 : f32
    %17 = vector.broadcast %cst_9 : f32 to vector<8x1xf32>
    %18 = arith.addf %14, %17 : vector<8x1xf32>
    %19 = math.rsqrt %18 : vector<8x1xf32>
    %20 = vector.broadcast %19 : vector<8x1xf32> to vector<8x64xf32>
    %21 = arith.mulf %16, %20 : vector<8x64xf32>
    %22 = vector.broadcast %2 : vector<1x64xf32> to vector<8x64xf32>
    %23 = arith.mulf %21, %22 : vector<8x64xf32>
    %24 = vector.broadcast %3 : vector<1x64xf32> to vector<8x64xf32>
    %25 = arith.addf %23, %24 : vector<8x64xf32>
    %26 = arith.truncf %25 : vector<8x64xf32> to vector<8x64xbf16>
    %c0_10 = arith.constant 0 : index
    %c0_11 = arith.constant 0 : index
    %27 = vector.load %arg5[%c0_10, %c0_11] : memref<64x64xbf16, #tpu.memory_space<vmem>>, vector<64x64xbf16>
    %cst_12 = arith.constant dense<0.000000e+00> : vector<8x64xf32>
    %28 = tpu.matmul %26, %27, %cst_12 {dimension_numbers = #tpu.dot_dimension_numbers<[1], [0], [0], [1], [0, 0, 1, 1], [], []>} : vector<8x64xbf16>, vector<64x64xbf16>, vector<8x64xf32> -> vector<8x64xf32>
    %c0_13 = arith.constant 0 : index
    %c0_14 = arith.constant 0 : index
    %29 = vector.load %arg6[%c0_13, %c0_14] : memref<1x64xf32, #tpu.memory_space<vmem>>, vector<1x64xf32>
    %30 = vector.broadcast %29 : vector<1x64xf32> to vector<8x64xf32>
    %31 = arith.addf %28, %30 : vector<8x64xf32>
    %32 = arith.truncf %31 : vector<8x64xf32> to vector<8x64xbf16>
    %33 = vector.extract_strided_slice %32 {offsets = [0, 0], sizes = [8, 8], strides = [1, 1]} : vector<8x64xbf16> to vector<8x8xbf16>
    %c0_15 = arith.constant 0 : index
    %c0_16 = arith.constant 0 : index
    %c0_17 = arith.constant 0 : index
    %c0_18 = arith.constant 0 : index
    %34 = vector.load %arg7[%c0_15, %c0_16, %c0_17, %c0_18] : memref<1x4x8x8xbf16, #tpu.memory_space<vmem>>, vector<1x1x8x8xbf16>
    %35 = vector.shape_cast %34 : vector<1x1x8x8xbf16> to vector<8x8xbf16>
    %36 = vector.shape_cast %33 : vector<8x8xbf16> to vector<1x1x8x8xbf16>
    tpu.vector_store %arg7[%c0_15, %c0_16, %c0_17, %c0_18], %36 {strides = array<i32>} : memref<1x4x8x8xbf16, #tpu.memory_space<vmem>>, vector<1x1x8x8xbf16>,
    %37 = vector.extract_strided_slice %32 {offsets = [0, 32], sizes = [8, 8], strides = [1, 1]} : vector<8x64xbf16> to vector<8x8xbf16>
    %c0_19 = arith.constant 0 : index
    %c0_20 = arith.constant 0 : index
    %c0_21 = arith.constant 0 : index
    %c0_22 = arith.constant 0 : index
    %38 = vector.load %arg8[%c0_19, %c0_20, %c0_21, %c0_22] : memref<1x4x8x8xbf16, #tpu.memory_space<vmem>>, vector<1x1x8x8xbf16>
    %39 = vector.shape_cast %38 : vector<1x1x8x8xbf16> to vector<8x8xbf16>
    %40 = vector.shape_cast %37 : vector<8x8xbf16> to vector<1x1x8x8xbf16>
    tpu.vector_store %arg8[%c0_19, %c0_20, %c0_21, %c0_22], %40 {strides = array<i32>} : memref<1x4x8x8xbf16, #tpu.memory_space<vmem>>, vector<1x1x8x8xbf16>,
    %41 = vector.extract_strided_slice %32 {offsets = [0, 8], sizes = [8, 8], strides = [1, 1]} : vector<8x64xbf16> to vector<8x8xbf16>
    %c0_23 = arith.constant 0 : index
    %c1 = arith.constant 1 : index
    %c0_24 = arith.constant 0 : index
    %c0_25 = arith.constant 0 : index
    %42 = vector.load %arg7[%c0_23, %c1, %c0_24, %c0_25] : memref<1x4x8x8xbf16, #tpu.memory_space<vmem>>, vector<1x1x8x8xbf16>
    %43 = vector.shape_cast %42 : vector<1x1x8x8xbf16> to vector<8x8xbf16>
    %44 = vector.shape_cast %41 : vector<8x8xbf16> to vector<1x1x8x8xbf16>
    tpu.vector_store %arg7[%c0_23, %c1, %c0_24, %c0_25], %44 {strides = array<i32>} : memref<1x4x8x8xbf16, #tpu.memory_space<vmem>>, vector<1x1x8x8xbf16>,
    %45 = vector.extract_strided_slice %32 {offsets = [0, 40], sizes = [8, 8], strides = [1, 1]} : vector<8x64xbf16> to vector<8x8xbf16>
    %c0_26 = arith.constant 0 : index
    %c1_27 = arith.constant 1 : index
    %c0_28 = arith.constant 0 : index
    %c0_29 = arith.constant 0 : index
    %46 = vector.load %arg8[%c0_26, %c1_27, %c0_28, %c0_29] : memref<1x4x8x8xbf16, #tpu.memory_space<vmem>>, vector<1x1x8x8xbf16>
    %47 = vector.shape_cast %46 : vector<1x1x8x8xbf16> to vector<8x8xbf16>
    %48 = vector.shape_cast %45 : vector<8x8xbf16> to vector<1x1x8x8xbf16>
    tpu.vector_store %arg8[%c0_26, %c1_27, %c0_28, %c0_29], %48 {strides = array<i32>} : memref<1x4x8x8xbf16, #tpu.memory_space<vmem>>, vector<1x1x8x8xbf16>,
    %49 = vector.extract_strided_slice %32 {offsets = [0, 16], sizes = [8, 8], strides = [1, 1]} : vector<8x64xbf16> to vector<8x8xbf16>
    %c0_30 = arith.constant 0 : index
    %c2 = arith.constant 2 : index
    %c0_31 = arith.constant 0 : index
    %c0_32 = arith.constant 0 : index
    %50 = vector.load %arg7[%c0_30, %c2, %c0_31, %c0_32] : memref<1x4x8x8xbf16, #tpu.memory_space<vmem>>, vector<1x1x8x8xbf16>
    %51 = vector.shape_cast %50 : vector<1x1x8x8xbf16> to vector<8x8xbf16>
    %52 = vector.shape_cast %49 : vector<8x8xbf16> to vector<1x1x8x8xbf16>
    tpu.vector_store %arg7[%c0_30, %c2, %c0_31, %c0_32], %52 {strides = array<i32>} : memref<1x4x8x8xbf16, #tpu.memory_space<vmem>>, vector<1x1x8x8xbf16>,
    %53 = vector.extract_strided_slice %32 {offsets = [0, 48], sizes = [8, 8], strides = [1, 1]} : vector<8x64xbf16> to vector<8x8xbf16>
    %c0_33 = arith.constant 0 : index
    %c2_34 = arith.constant 2 : index
    %c0_35 = arith.constant 0 : index
    %c0_36 = arith.constant 0 : index
    %54 = vector.load %arg8[%c0_33, %c2_34, %c0_35, %c0_36] : memref<1x4x8x8xbf16, #tpu.memory_space<vmem>>, vector<1x1x8x8xbf16>
    %55 = vector.shape_cast %54 : vector<1x1x8x8xbf16> to vector<8x8xbf16>
    %56 = vector.shape_cast %53 : vector<8x8xbf16> to vector<1x1x8x8xbf16>
    tpu.vector_store %arg8[%c0_33, %c2_34, %c0_35, %c0_36], %56 {strides = array<i32>} : memref<1x4x8x8xbf16, #tpu.memory_space<vmem>>, vector<1x1x8x8xbf16>,
    %57 = vector.extract_strided_slice %32 {offsets = [0, 24], sizes = [8, 8], strides = [1, 1]} : vector<8x64xbf16> to vector<8x8xbf16>
    %c0_37 = arith.constant 0 : index
    %c3 = arith.constant 3 : index
    %c0_38 = arith.constant 0 : index
    %c0_39 = arith.constant 0 : index
    %58 = vector.load %arg7[%c0_37, %c3, %c0_38, %c0_39] : memref<1x4x8x8xbf16, #tpu.memory_space<vmem>>, vector<1x1x8x8xbf16>
    %59 = vector.shape_cast %58 : vector<1x1x8x8xbf16> to vector<8x8xbf16>
    %60 = vector.shape_cast %57 : vector<8x8xbf16> to vector<1x1x8x8xbf16>
    tpu.vector_store %arg7[%c0_37, %c3, %c0_38, %c0_39], %60 {strides = array<i32>} : memref<1x4x8x8xbf16, #tpu.memory_space<vmem>>, vector<1x1x8x8xbf16>,
    %61 = vector.extract_strided_slice %32 {offsets = [0, 56], sizes = [8, 8], strides = [1, 1]} : vector<8x64xbf16> to vector<8x8xbf16>
    %c0_40 = arith.constant 0 : index
    %c3_41 = arith.constant 3 : index
    %c0_42 = arith.constant 0 : index
    %c0_43 = arith.constant 0 : index
    %62 = vector.load %arg8[%c0_40, %c3_41, %c0_42, %c0_43] : memref<1x4x8x8xbf16, #tpu.memory_space<vmem>>, vector<1x1x8x8xbf16>
    %63 = vector.shape_cast %62 : vector<1x1x8x8xbf16> to vector<8x8xbf16>
    %64 = vector.shape_cast %61 : vector<8x8xbf16> to vector<1x1x8x8xbf16>
    tpu.vector_store %arg8[%c0_40, %c3_41, %c0_42, %c0_43], %64 {strides = array<i32>} : memref<1x4x8x8xbf16, #tpu.memory_space<vmem>>, vector<1x1x8x8xbf16>,
    return
  }
  func.func @transform_0(%arg0: i32, %arg1: i32) -> (i32, i32, i32) {
    %c0_i32 = arith.constant 0 : i32
    %c0_i32_0 = arith.constant 0 : i32
    return %arg0, %arg1, %c0_i32 : i32, i32, i32
  }
  func.func @transform_1(%arg0: i32, %arg1: i32) -> (i32, i32) {
    %c0_i32 = arith.constant 0 : i32
    %c0_i32_0 = arith.constant 0 : i32
    %c0_i32_1 = arith.constant 0 : i32
    return %c0_i32, %c0_i32_0 : i32, i32
  }
  func.func @transform_2(%arg0: i32, %arg1: i32) -> (i32, i32) {
    %c0_i32 = arith.constant 0 : i32
    %c0_i32_0 = arith.constant 0 : i32
    %c0_i32_1 = arith.constant 0 : i32
    return %c0_i32, %c0_i32_0 : i32, i32
  }
  func.func @transform_3(%arg0: i32, %arg1: i32) -> (i32, i32) {
    %c0_i32 = arith.constant 0 : i32
    %c0_i32_0 = arith.constant 0 : i32
    %c0_i32_1 = arith.constant 0 : i32
    return %c0_i32, %c0_i32_0 : i32, i32
  }
  func.func @transform_4(%arg0: i32, %arg1: i32) -> (i32, i32) {
    %c0_i32 = arith.constant 0 : i32
    %c0_i32_0 = arith.constant 0 : i32
    %c0_i32_1 = arith.constant 0 : i32
    return %c0_i32, %c0_i32_0 : i32, i32
  }
  func.func @transform_5(%arg0: i32, %arg1: i32) -> (i32, i32, i32, i32) {
    %c0_i32 = arith.constant 0 : i32
    %c0_i32_0 = arith.constant 0 : i32
    %c0_i32_1 = arith.constant 0 : i32
    return %arg0, %c0_i32, %arg1, %c0_i32_0 : i32, i32, i32, i32
  }
  func.func @transform_6(%arg0: i32, %arg1: i32) -> (i32, i32, i32, i32) {
    %c0_i32 = arith.constant 0 : i32
    %c0_i32_0 = arith.constant 0 : i32
    %c0_i32_1 = arith.constant 0 : i32
    return %arg0, %c0_i32, %arg1, %c0_i32_0 : i32, i32, i32, i32
  }
}

module attributes {stable_mosaic.version = 11 : i64} {
  func.func @_kv_proj_kernel(%arg0: i32, %arg1: i32, %arg2: memref<1x8x64xf32, #tpu.memory_space<vmem>>, %arg3: memref<1x64xf32, #tpu.memory_space<vmem>>, %arg4: memref<1x64xf32, #tpu.memory_space<vmem>>, %arg5: memref<64x64xbf16, #tpu.memory_space<vmem>>, %arg6: memref<1x64xf32, #tpu.memory_space<vmem>>, %arg7: memref<1x4x8x8xbf16, #tpu.memory_space<vmem>>, %arg8: memref<1x4x8x8xbf16, #tpu.memory_space<vmem>>) attributes {dimension_semantics = [#tpu.dimension_semantics<parallel>, #tpu.dimension_semantics<parallel>], iteration_bounds = array<i64: 2, 3>, scalar_prefetch = 0 : i64, scratch_operands = 0 : i64, tpu.core_type = #tpu.core_type<tc>, window_params = [{transform_indices = @transform_0, window_bounds = array<i64: 1, 8, 64>}, {pipeline_mode = #tpu.pipeline_mode<synchronous>, transform_indices = @transform_1, window_bounds = array<i64: 1, 64>}, {pipeline_mode = #tpu.pipeline_mode<synchronous>, transform_indices = @transform_2, window_bounds = array<i64: 1, 64>}, {pipeline_mode = #tpu.pipeline_mode<synchronous>, transform_indices = @transform_3, window_bounds = array<i64: 64, 64>}, {pipeline_mode = #tpu.pipeline_mode<synchronous>, transform_indices = @transform_4, window_bounds = array<i64: 1, 64>}, {transform_indices = @transform_5, window_bounds = array<i64: 1, 4, 8, 8>}, {transform_indices = @transform_6, window_bounds = array<i64: 1, 4, 8, 8>}]} {
    %c0 = arith.constant 0 : index
    %c0_0 = arith.constant 0 : index
    %c0_1 = arith.constant 0 : index
    %0 = vector.load %arg2[%c0, %c0_0, %c0_1] : memref<1x8x64xf32, #tpu.memory_space<vmem>>, vector<1x8x64xf32>
    %1 = vector.shape_cast %0 : vector<1x8x64xf32> to vector<8x64xf32>
    %c0_2 = arith.constant 0 : index
    %c0_3 = arith.constant 0 : index
    %2 = vector.load %arg3[%c0_2, %c0_3] : memref<1x64xf32, #tpu.memory_space<vmem>>, vector<1x64xf32>
    %c0_4 = arith.constant 0 : index
    %c0_5 = arith.constant 0 : index
    %3 = vector.load %arg4[%c0_4, %c0_5] : memref<1x64xf32, #tpu.memory_space<vmem>>, vector<1x64xf32>
    %cst = arith.constant dense<0.000000e+00> : vector<8xf32>
    %4 = vector.multi_reduction <add>, %1, %cst [1] : vector<8x64xf32> to vector<8xf32>
    %5 = vector.shape_cast %4 : vector<8xf32> to vector<8x1xf32>
    %cst_6 = arith.constant 6.400000e+01 : f32
    %6 = vector.broadcast %cst_6 : f32 to vector<8x1xf32>
    %7 = arith.divf %5, %6 : vector<8x1xf32>
    %8 = arith.mulf %1, %1 : vector<8x64xf32>
    %cst_7 = arith.constant dense<0.000000e+00> : vector<8xf32>
    %9 = vector.multi_reduction <add>, %8, %cst_7 [1] : vector<8x64xf32> to vector<8xf32>
    %10 = vector.shape_cast %9 : vector<8xf32> to vector<8x1xf32>
    %cst_8 = arith.constant 6.400000e+01 : f32
    %11 = vector.broadcast %cst_8 : f32 to vector<8x1xf32>
    %12 = arith.divf %10, %11 : vector<8x1xf32>
    %13 = arith.mulf %7, %7 : vector<8x1xf32>
    %14 = arith.subf %12, %13 : vector<8x1xf32>
    %15 = vector.broadcast %7 : vector<8x1xf32> to vector<8x64xf32>
    %16 = arith.subf %1, %15 : vector<8x64xf32>
    %cst_9 = arith.constant 9.99999974E-6 : f32
    %17 = vector.broadcast %cst_9 : f32 to vector<8x1xf32>
    %18 = arith.addf %14, %17 : vector<8x1xf32>
    %19 = math.rsqrt %18 : vector<8x1xf32>
    %20 = vector.broadcast %19 : vector<8x1xf32> to vector<8x64xf32>
    %21 = arith.mulf %16, %20 : vector<8x64xf32>
    %22 = vector.broadcast %2 : vector<1x64xf32> to vector<8x64xf32>
    %23 = arith.mulf %21, %22 : vector<8x64xf32>
    %24 = vector.broadcast %3 : vector<1x64xf32> to vector<8x64xf32>
    %25 = arith.addf %23, %24 : vector<8x64xf32>
    %26 = arith.truncf %25 : vector<8x64xf32> to vector<8x64xbf16>
    %c0_10 = arith.constant 0 : index
    %c0_11 = arith.constant 0 : index
    %27 = vector.load %arg5[%c0_10, %c0_11] : memref<64x64xbf16, #tpu.memory_space<vmem>>, vector<64x64xbf16>
    %cst_12 = arith.constant dense<0.000000e+00> : vector<8x64xf32>
    %28 = tpu.matmul %26, %27, %cst_12 {dimension_numbers = #tpu.dot_dimension_numbers<[1], [0], [0], [1], [0, 0, 1, 1], [], []>} : vector<8x64xbf16>, vector<64x64xbf16>, vector<8x64xf32> -> vector<8x64xf32>
    %c0_13 = arith.constant 0 : index
    %c0_14 = arith.constant 0 : index
    %29 = vector.load %arg6[%c0_13, %c0_14] : memref<1x64xf32, #tpu.memory_space<vmem>>, vector<1x64xf32>
    %30 = vector.broadcast %29 : vector<1x64xf32> to vector<8x64xf32>
    %31 = arith.addf %28, %30 : vector<8x64xf32>
    %32 = arith.truncf %31 : vector<8x64xf32> to vector<8x64xbf16>
    %33 = vector.extract_strided_slice %32 {offsets = [0, 0], sizes = [8, 8], strides = [1, 1]} : vector<8x64xbf16> to vector<8x8xbf16>
    %c0_15 = arith.constant 0 : index
    %c0_16 = arith.constant 0 : index
    %c0_17 = arith.constant 0 : index
    %c0_18 = arith.constant 0 : index
    %34 = vector.load %arg7[%c0_15, %c0_16, %c0_17, %c0_18] : memref<1x4x8x8xbf16, #tpu.memory_space<vmem>>, vector<1x1x8x8xbf16>
    %35 = vector.shape_cast %34 : vector<1x1x8x8xbf16> to vector<8x8xbf16>
    %36 = vector.shape_cast %33 : vector<8x8xbf16> to vector<1x1x8x8xbf16>
    tpu.vector_store %arg7[%c0_15, %c0_16, %c0_17, %c0_18], %36 {strides = array<i32>} : memref<1x4x8x8xbf16, #tpu.memory_space<vmem>>, vector<1x1x8x8xbf16>,
    %37 = vector.extract_strided_slice %32 {offsets = [0, 32], sizes = [8, 8], strides = [1, 1]} : vector<8x64xbf16> to vector<8x8xbf16>
    %c0_19 = arith.constant 0 : index
    %c0_20 = arith.constant 0 : index
    %c0_21 = arith.constant 0 : index
    %c0_22 = arith.constant 0 : index
    %38 = vector.load %arg8[%c0_19, %c0_20, %c0_21, %c0_22] : memref<1x4x8x8xbf16, #tpu.memory_space<vmem>>, vector<1x1x8x8xbf16>
    %39 = vector.shape_cast %38 : vector<1x1x8x8xbf16> to vector<8x8xbf16>
    %40 = vector.shape_cast %37 : vector<8x8xbf16> to vector<1x1x8x8xbf16>
    tpu.vector_store %arg8[%c0_19, %c0_20, %c0_21, %c0_22], %40 {strides = array<i32>} : memref<1x4x8x8xbf16, #tpu.memory_space<vmem>>, vector<1x1x8x8xbf16>,
    %41 = vector.extract_strided_slice %32 {offsets = [0, 8], sizes = [8, 8], strides = [1, 1]} : vector<8x64xbf16> to vector<8x8xbf16>
    %c0_23 = arith.constant 0 : index
    %c1 = arith.constant 1 : index
    %c0_24 = arith.constant 0 : index
    %c0_25 = arith.constant 0 : index
    %42 = vector.load %arg7[%c0_23, %c1, %c0_24, %c0_25] : memref<1x4x8x8xbf16, #tpu.memory_space<vmem>>, vector<1x1x8x8xbf16>
    %43 = vector.shape_cast %42 : vector<1x1x8x8xbf16> to vector<8x8xbf16>
    %44 = vector.shape_cast %41 : vector<8x8xbf16> to vector<1x1x8x8xbf16>
    tpu.vector_store %arg7[%c0_23, %c1, %c0_24, %c0_25], %44 {strides = array<i32>} : memref<1x4x8x8xbf16, #tpu.memory_space<vmem>>, vector<1x1x8x8xbf16>,
    %45 = vector.extract_strided_slice %32 {offsets = [0, 40], sizes = [8, 8], strides = [1, 1]} : vector<8x64xbf16> to vector<8x8xbf16>
    %c0_26 = arith.constant 0 : index
    %c1_27 = arith.constant 1 : index
    %c0_28 = arith.constant 0 : index
    %c0_29 = arith.constant 0 : index
    %46 = vector.load %arg8[%c0_26, %c1_27, %c0_28, %c0_29] : memref<1x4x8x8xbf16, #tpu.memory_space<vmem>>, vector<1x1x8x8xbf16>
    %47 = vector.shape_cast %46 : vector<1x1x8x8xbf16> to vector<8x8xbf16>
    %48 = vector.shape_cast %45 : vector<8x8xbf16> to vector<1x1x8x8xbf16>
    tpu.vector_store %arg8[%c0_26, %c1_27, %c0_28, %c0_29], %48 {strides = array<i32>} : memref<1x4x8x8xbf16, #tpu.memory_space<vmem>>, vector<1x1x8x8xbf16>,
    %49 = vector.extract_strided_slice %32 {offsets = [0, 16], sizes = [8, 8], strides = [1, 1]} : vector<8x64xbf16> to vector<8x8xbf16>
    %c0_30 = arith.constant 0 : index
    %c2 = arith.constant 2 : index
    %c0_31 = arith.constant 0 : index
    %c0_32 = arith.constant 0 : index
    %50 = vector.load %arg7[%c0_30, %c2, %c0_31, %c0_32] : memref<1x4x8x8xbf16, #tpu.memory_space<vmem>>, vector<1x1x8x8xbf16>
    %51 = vector.shape_cast %50 : vector<1x1x8x8xbf16> to vector<8x8xbf16>
    %52 = vector.shape_cast %49 : vector<8x8xbf16> to vector<1x1x8x8xbf16>
    tpu.vector_store %arg7[%c0_30, %c2, %c0_31, %c0_32], %52 {strides = array<i32>} : memref<1x4x8x8xbf16, #tpu.memory_space<vmem>>, vector<1x1x8x8xbf16>,
    %53 = vector.extract_strided_slice %32 {offsets = [0, 48], sizes = [8, 8], strides = [1, 1]} : vector<8x64xbf16> to vector<8x8xbf16>
    %c0_33 = arith.constant 0 : index
    %c2_34 = arith.constant 2 : index
    %c0_35 = arith.constant 0 : index
    %c0_36 = arith.constant 0 : index
    %54 = vector.load %arg8[%c0_33, %c2_34, %c0_35, %c0_36] : memref<1x4x8x8xbf16, #tpu.memory_space<vmem>>, vector<1x1x8x8xbf16>
    %55 = vector.shape_cast %54 : vector<1x1x8x8xbf16> to vector<8x8xbf16>
    %56 = vector.shape_cast %53 : vector<8x8xbf16> to vector<1x1x8x8xbf16>
    tpu.vector_store %arg8[%c0_33, %c2_34, %c0_35, %c0_36], %56 {strides = array<i32>} : memref<1x4x8x8xbf16, #tpu.memory_space<vmem>>, vector<1x1x8x8xbf16>,
    %57 = vector.extract_strided_slice %32 {offsets = [0, 24], sizes = [8, 8], strides = [1, 1]} : vector<8x64xbf16> to vector<8x8xbf16>
    %c0_37 = arith.constant 0 : index
    %c3 = arith.constant 3 : index
    %c0_38 = arith.constant 0 : index
    %c0_39 = arith.constant 0 : index
    %58 = vector.load %arg7[%c0_37, %c3, %c0_38, %c0_39] : memref<1x4x8x8xbf16, #tpu.memory_space<vmem>>, vector<1x1x8x8xbf16>
    %59 = vector.shape_cast %58 : vector<1x1x8x8xbf16> to vector<8x8xbf16>
    %60 = vector.shape_cast %57 : vector<8x8xbf16> to vector<1x1x8x8xbf16>
    tpu.vector_store %arg7[%c0_37, %c3, %c0_38, %c0_39], %60 {strides = array<i32>} : memref<1x4x8x8xbf16, #tpu.memory_space<vmem>>, vector<1x1x8x8xbf16>,
    %61 = vector.extract_strided_slice %32 {offsets = [0, 56], sizes = [8, 8], strides = [1, 1]} : vector<8x64xbf16> to vector<8x8xbf16>
    %c0_40 = arith.constant 0 : index
    %c3_41 = arith.constant 3 : index
    %c0_42 = arith.constant 0 : index
    %c0_43 = arith.constant 0 : index
    %62 = vector.load %arg8[%c0_40, %c3_41, %c0_42, %c0_43] : memref<1x4x8x8xbf16, #tpu.memory_space<vmem>>, vector<1x1x8x8xbf16>
    %63 = vector.shape_cast %62 : vector<1x1x8x8xbf16> to vector<8x8xbf16>
    %64 = vector.shape_cast %61 : vector<8x8xbf16> to vector<1x1x8x8xbf16>
    tpu.vector_store %arg8[%c0_40, %c3_41, %c0_42, %c0_43], %64 {strides = array<i32>} : memref<1x4x8x8xbf16, #tpu.memory_space<vmem>>, vector<1x1x8x8xbf16>,
    return
  }
  func.func @transform_0(%arg0: i32, %arg1: i32) -> (i32, i32, i32) {
    %c0_i32 = arith.constant 0 : i32
    %c0_i32_0 = arith.constant 0 : i32
    return %arg0, %arg1, %c0_i32 : i32, i32, i32
  }
  func.func @transform_1(%arg0: i32, %arg1: i32) -> (i32, i32) {
    %c0_i32 = arith.constant 0 : i32
    %c0_i32_0 = arith.constant 0 : i32
    %c0_i32_1 = arith.constant 0 : i32
    return %c0_i32, %c0_i32_0 : i32, i32
  }
  func.func @transform_2(%arg0: i32, %arg1: i32) -> (i32, i32) {
    %c0_i32 = arith.constant 0 : i32
    %c0_i32_0 = arith.constant 0 : i32
    %c0_i32_1 = arith.constant 0 : i32
    return %c0_i32, %c0_i32_0 : i32, i32
  }
  func.func @transform_3(%arg0: i32, %arg1: i32) -> (i32, i32) {
    %c0_i32 = arith.constant 0 : i32
    %c0_i32_0 = arith.constant 0 : i32
    %c0_i32_1 = arith.constant 0 : i32
    return %c0_i32, %c0_i32_0 : i32, i32
  }
  func.func @transform_4(%arg0: i32, %arg1: i32) -> (i32, i32) {
    %c0_i32 = arith.constant 0 : i32
    %c0_i32_0 = arith.constant 0 : i32
    %c0_i32_1 = arith.constant 0 : i32
    return %c0_i32, %c0_i32_0 : i32, i32
  }
  func.func @transform_5(%arg0: i32, %arg1: i32) -> (i32, i32, i32, i32) {
    %c0_i32 = arith.constant 0 : i32
    %c0_i32_0 = arith.constant 0 : i32
    %c0_i32_1 = arith.constant 0 : i32
    return %arg0, %c0_i32, %arg1, %c0_i32_0 : i32, i32, i32, i32
  }
  func.func @transform_6(%arg0: i32, %arg1: i32) -> (i32, i32, i32, i32) {
    %c0_i32 = arith.constant 0 : i32
    %c0_i32_0 = arith.constant 0 : i32
    %c0_i32_1 = arith.constant 0 : i32
    return %arg0, %c0_i32, %arg1, %c0_i32_0 : i32, i32, i32, i32
  }
}

</mosaic_0001>

<llo_original>
// kernel: tpu_custom_call.1
$region0: #{tpu_custom_call.1}
  #allocation0 [shape = 'u32[]', space=smem, size = 0x4, offset = 0x4, fixed_abs, tag = 'smem constant byte address 0x4 - core index']
  #allocation1 [shape = 'u32[144,128]{1,0:T(1,128)}', space=vmem, size = 0x12000, scoped, tag = 'internal scratch']
  %s0 = inlined_call_operand.hbm [shape: f32[2,24,64], index: 0, kind: input, shape index: {}]
  %s1 = inlined_call_operand.vmem [shape: f32[1,64], index: 1, kind: input, shape index: {}]
  %s2 = inlined_call_operand.vmem [shape: f32[1,64], index: 2, kind: input, shape index: {}]
  %s3 = inlined_call_operand.hbm [shape: bf16[64,64], index: 3, kind: input, shape index: {}]
  %s4 = inlined_call_operand.vmem [shape: f32[1,64], index: 4, kind: input, shape index: {}]
  %s5 = inlined_call_operand.vmem [shape: bf16[2,4,24,8], index: 5, kind: output, shape index: {0}]
  %s6 = inlined_call_operand.vmem [shape: bf16[2,4,24,8], index: 6, kind: output, shape index: {1}]
  %7 = xla_tuple %s5, %s6
  %s8 = sld [smem:[#allocation0]]
  $region143: #{tpu_custom_call.1} parent=0
    _
  %s10 = ssub.s32 1, %s8
  %s11 = scalar_select 0, %s10, %s8
  $region1: #{tpu_custom_call.1} parent=0
    #allocation2 [shape = 'u8[8192]{0}', space=vmem, size = 0x2000, scoped, tag = 'input window, operand 0']
    #allocation3 [shape = 's32[2]{0}', space=sflag, size = 0x8, scoped, tag = 'scoped memory for tpu_custom_call.1']
    #allocation4 [shape = 'u8[16384]{0}', space=vmem, size = 0x4000, scoped, tag = 'input window, operand 3, single buffered']
    #allocation5 [shape = 's32[1]{0}', space=sflag, size = 0x4, scoped, tag = 'scoped memory for tpu_custom_call.1']
    #allocation6 [shape = 'u8[16384]{0}', space=vmem, size = 0x4000, scoped, tag = 'output window, operand 0']
    #allocation7 [shape = 'u8[16384]{0}', space=vmem, size = 0x4000, scoped, tag = 'output window, operand 1']
    %12 = vsyncpa [#allocation3], 0
    %s13 = scalar_lea.sflag [#allocation3], 1
    %14 = vsyncpa %s13, 0
    %15 = vsyncpa [#allocation5], 0
    loop: start=0, step=1, limit=8
    $region2: #{tpu_custom_call.1} parent=1 // loop_pre_header
      _
    $region3: #{tpu_custom_call.1} parent=1 // loop_header
      %s17 = sphi 0, %s21
      %p18 = scmp.ge.s32.totalorder %s17, 8
      %s24 = sphi 0, %s36
      %s25 = sphi 0, %s32
      %s26 = sphi 0, %s24
      %s27 = sphi 0, %s25
      %s28 = sphi 0, %s26
      %s29 = sphi 0, %s27
      %s41 = sphi 0, %s43
      %s44 = sphi 0, %s41
      %s45 = sphi 0, %s44
      %s61 = sphi 0, %s45
      %s65 = sphi 0, %s65
      %s67 = sphi 0, %s65
      %s68 = sphi 0, %s67
      %s82 = sphi 0, %s68
      %s86 = sphi 0, %s86
      %s88 = sphi 0, %s86
      %s89 = sphi 0, %s88
      %s103 = sphi 0, %s89
      %s107 = sphi 0, %s107
      %s109 = sphi 0, %s107
      %s110 = sphi 0, %s109
      %s124 = sphi 0, %s110
      %s128 = sphi 0, %s128
      %s130 = sphi 0, %s128
      %s131 = sphi 0, %s130
      %s145 = sphi 0, %s131
      %s153 = sphi 0, %s155
      %s156 = sphi 0, %s153
      %s157 = sphi 0, %s156
      %s173 = sphi 0, %s157
      %s181 = sphi 0, %s183
      %s184 = sphi 0, %s181
      %s185 = sphi 0, %s184
      %s201 = sphi 0, %s185
    $region4: #{tpu_custom_call.1} parent=1 // loop_header_branch
      %20 = sbr.rel (%p18) target = $region8
    $region5: #{tpu_custom_call.1} parent=1 // loop_body
      %s22 = ssub.s32 %s17, 1
      %s23 = ssub.s32 %s17, 2
      %s30 = sadd.s32 1, %s25
      %p31 = scmp.ge.s32.totalorder %s30, 3
      %s32 = scalar_select %p31, 0, %s30
      %s33 = sadd.s32 1, %s24
      %s34 = scalar_select %p31, %s33, %s24
      %p35 = scmp.ge.s32.totalorder %s34, 2
      %s36 = scalar_select %p35, 0, %s34
      %s37 = ssub.s32 %s24, %s36
      %s38 = ssub.s32 %s25, %s32
      %s39 = sor.u32 %s37, %s38
      %p40 = scmp.eq.s32.totalorder %s39, 0
      %s42 = sadd.s32 %s41, 1
      %s43 = scalar_select %p40, %s41, %s42
      %p46 = pneg %p40
      %p47 = scmp.eq.s32.totalorder %s17, 5
      %p48 = por %p46, %p47
      %p49 = scmp.ne.s32.totalorder %s41, %s44
      %p50 = scmp.eq.s32.totalorder %s17, 0
      %p51 = por %p49, %p50
      %p52 = scmp.ne.s32.totalorder %s41, %s44
      %p53 = scmp.eq.s32.totalorder %s22, 5
      %p54 = por %p52, %p53
      %p55 = scmp.ne.s32.totalorder %s44, %s45
      %p56 = scmp.eq.s32.totalorder %s22, 0
      %p57 = por %p55, %p56
      %p58 = scmp.ne.s32.totalorder %s44, %s45
      %p59 = scmp.eq.s32.totalorder %s23, 5
      %p60 = por %p58, %p59
      %p62 = scmp.ne.s32.totalorder %s45, %s61
      %p63 = scmp.eq.s32.totalorder %s23, 0
      %p64 = por %p62, %p63
      %s66 = sadd.s32 %s65, 1
      %p69 = scmp.eq.s32.totalorder %s17, 5
      %p70 = scmp.ne.s32.totalorder %s65, %s67
      %p71 = scmp.eq.s32.totalorder %s17, 0
      %p72 = por %p70, %p71
      %p73 = scmp.ne.s32.totalorder %s65, %s67
      %p74 = scmp.eq.s32.totalorder %s22, 5
      %p75 = por %p73, %p74
      %p76 = scmp.ne.s32.totalorder %s67, %s68
      %p77 = scmp.eq.s32.totalorder %s22, 0
      %p78 = por %p76, %p77
      %p79 = scmp.ne.s32.totalorder %s67, %s68
      %p80 = scmp.eq.s32.totalorder %s23, 5
      %p81 = por %p79, %p80
      %p83 = scmp.ne.s32.totalorder %s68, %s82
      %p84 = scmp.eq.s32.totalorder %s23, 0
      %p85 = por %p83, %p84
      %s87 = sadd.s32 %s86, 1
      %p90 = scmp.eq.s32.totalorder %s17, 5
      %p91 = scmp.ne.s32.totalorder %s86, %s88
      %p92 = scmp.eq.s32.totalorder %s17, 0
      %p93 = por %p91, %p92
      %p94 = scmp.ne.s32.totalorder %s86, %s88
      %p95 = scmp.eq.s32.totalorder %s22, 5
      %p96 = por %p94, %p95
      %p97 = scmp.ne.s32.totalorder %s88, %s89
      %p98 = scmp.eq.s32.totalorder %s22, 0
      %p99 = por %p97, %p98
      %p100 = scmp.ne.s32.totalorder %s88, %s89
      %p101 = scmp.eq.s32.totalorder %s23, 5
      %p102 = por %p100, %p101
      %p104 = scmp.ne.s32.totalorder %s89, %s103
      %p105 = scmp.eq.s32.totalorder %s23, 0
      %p106 = por %p104, %p105
      %s108 = sadd.s32 %s107, 1
      %p111 = scmp.eq.s32.totalorder %s17, 5
      %p112 = scmp.ne.s32.totalorder %s107, %s109
      %p113 = scmp.eq.s32.totalorder %s17, 0
      %p114 = por %p112, %p113
      %p115 = scmp.ne.s32.totalorder %s107, %s109
      %p116 = scmp.eq.s32.totalorder %s22, 5
      %p117 = por %p115, %p116
      %p118 = scmp.ne.s32.totalorder %s109, %s110
      %p119 = scmp.eq.s32.totalorder %s22, 0
      %p120 = por %p118, %p119
      %p121 = scmp.ne.s32.totalorder %s109, %s110
      %p122 = scmp.eq.s32.totalorder %s23, 5
      %p123 = por %p121, %p122
      %p125 = scmp.ne.s32.totalorder %s110, %s124
      %p126 = scmp.eq.s32.totalorder %s23, 0
      %p127 = por %p125, %p126
      %s129 = sadd.s32 %s128, 1
      %p132 = scmp.eq.s32.totalorder %s17, 5
      %p133 = scmp.ne.s32.totalorder %s128, %s130
      %p134 = scmp.eq.s32.totalorder %s17, 0
      %p135 = por %p133, %p134
      %p136 = scmp.ne.s32.totalorder %s128, %s130
      %p137 = scmp.eq.s32.totalorder %s22, 5
      %p138 = por %p136, %p137
      %p139 = scmp.ne.s32.totalorder %s130, %s131
      %p140 = scmp.eq.s32.totalorder %s22, 0
      %p141 = por %p139, %p140
      %p142 = scmp.ne.s32.totalorder %s130, %s131
      %p143 = scmp.eq.s32.totalorder %s23, 5
      %p144 = por %p142, %p143
      %p146 = scmp.ne.s32.totalorder %s131, %s145
      %p147 = scmp.eq.s32.totalorder %s23, 0
      %p148 = por %p146, %p147
      %s149 = ssub.s32 %s24, %s36
      %s150 = ssub.s32 %s25, %s32
      %s151 = sor.u32 %s149, %s150
      %p152 = scmp.eq.s32.totalorder %s151, 0
      %s154 = sadd.s32 %s153, 1
      %s155 = scalar_select %p152, %s153, %s154
      %p158 = pneg %p152
      %p159 = scmp.eq.s32.totalorder %s17, 5
      %p160 = por %p158, %p159
      %p161 = scmp.ne.s32.totalorder %s153, %s156
      %p162 = scmp.eq.s32.totalorder %s17, 0
      %p163 = por %p161, %p162
      %p164 = scmp.ne.s32.totalorder %s153, %s156
      %p165 = scmp.eq.s32.totalorder %s22, 5
      %p166 = por %p164, %p165
      %p167 = scmp.ne.s32.totalorder %s156, %s157
      %p168 = scmp.eq.s32.totalorder %s22, 0
      %p169 = por %p167, %p168
      %p170 = scmp.ne.s32.totalorder %s156, %s157
      %p171 = scmp.eq.s32.totalorder %s23, 5
      %p172 = por %p170, %p171
      %p174 = scmp.ne.s32.totalorder %s157, %s173
      %p175 = scmp.eq.s32.totalorder %s23, 0
      %p176 = por %p174, %p175
      %s177 = ssub.s32 %s24, %s36
      %s178 = ssub.s32 %s25, %s32
      %s179 = sor.u32 %s177, %s178
      %p180 = scmp.eq.s32.totalorder %s179, 0
      %s182 = sadd.s32 %s181, 1
      %s183 = scalar_select %p180, %s181, %s182
      %p186 = pneg %p180
      %p187 = scmp.eq.s32.totalorder %s17, 5
      %p188 = por %p186, %p187
      %p189 = scmp.ne.s32.totalorder %s181, %s184
      %p190 = scmp.eq.s32.totalorder %s17, 0
      %p191 = por %p189, %p190
      %p192 = scmp.ne.s32.totalorder %s181, %s184
      %p193 = scmp.eq.s32.totalorder %s22, 5
      %p194 = por %p192, %p193
      %p195 = scmp.ne.s32.totalorder %s184, %s185
      %p196 = scmp.eq.s32.totalorder %s22, 0
      %p197 = por %p195, %p196
      %p198 = scmp.ne.s32.totalorder %s184, %s185
      %p199 = scmp.eq.s32.totalorder %s23, 5
      %p200 = por %p198, %p199
      %p202 = scmp.ne.s32.totalorder %s185, %s201
      %p203 = scmp.eq.s32.totalorder %s23, 0
      %p204 = por %p202, %p203
      %p205 = scmp.le.s32.totalorder 1, %s17
      %p206 = scmp.lt.s32.totalorder %s17, 7
      %p207 = pnand %p205, %p206
      %p208 = pneg %p207
      // Predicated region
      $region9: #{tpu_custom_call.1} parent=5 // pred_check
        _
      $region10: #{tpu_custom_call.1} parent=5 // pred_check_branch
        %210 = sbr.rel (%p207) target = $region12
      $region11: #{tpu_custom_call.1} parent=5 // pred_region
        %s211 = ssub.s32 %s17, 1
        // Predicated region
        $region13: #{tpu_custom_call.1} parent=11 // pred_check
          %p212 = pneg %p78
        $region14: #{tpu_custom_call.1} parent=11 // pred_check_branch
          %214 = sbr.rel (%p212) target = $region16
        $region15: #{tpu_custom_call.1} parent=11 // pred_region
          _
        $region16: #{tpu_custom_call.1} parent=11 // pred_fallthru
          _
        // Predicated region
        $region17: #{tpu_custom_call.1} parent=11 // pred_check
          %p215 = pneg %p99
        $region18: #{tpu_custom_call.1} parent=11 // pred_check_branch
          %217 = sbr.rel (%p215) target = $region20
        $region19: #{tpu_custom_call.1} parent=11 // pred_region
          _
        $region20: #{tpu_custom_call.1} parent=11 // pred_fallthru
          _
        // Predicated region
        $region21: #{tpu_custom_call.1} parent=11 // pred_check
          %p218 = pneg %p120
        $region22: #{tpu_custom_call.1} parent=11 // pred_check_branch
          %220 = sbr.rel (%p218) target = $region24
        $region23: #{tpu_custom_call.1} parent=11 // pred_region
          %s222 = ssub.s32 512, 512
          %223 = vsyncadd [#allocation5], %s222
          %s224 = sshll.u32 [#allocation4], 4
          %s225 = int_to_ptr.vmem [resolvable:$true] %s224
          %230 = dma.hbm_to_vmem [thread:$0]  %s3, 512, %s225, [#allocation5], 64, 64, 4
        $region24: #{tpu_custom_call.1} parent=11 // pred_fallthru
          _
        // Predicated region
        $region25: #{tpu_custom_call.1} parent=11 // pred_check
          %p231 = pneg %p141
        $region26: #{tpu_custom_call.1} parent=11 // pred_check_branch
          %233 = sbr.rel (%p231) target = $region28
        $region27: #{tpu_custom_call.1} parent=11 // pred_region
          _
        $region28: #{tpu_custom_call.1} parent=11 // pred_fallthru
          _
      $region12: #{tpu_custom_call.1} parent=5 // pred_fallthru
        _
      %p234 = scmp.lt.s32.totalorder %s17, 6
      // Predicated region
      $region29: #{tpu_custom_call.1} parent=5 // pred_check
        %p235 = pneg %p234
      $region30: #{tpu_custom_call.1} parent=5 // pred_check_branch
        %237 = sbr.rel (%p235) target = $region32
      $region31: #{tpu_custom_call.1} parent=5 // pred_region
        // Predicated region
        $region33: #{tpu_custom_call.1} parent=31 // pred_check
          %p238 = pneg %p51
        $region34: #{tpu_custom_call.1} parent=31 // pred_check_branch
          %240 = sbr.rel (%p238) target = $region36
        $region35: #{tpu_custom_call.1} parent=31 // pred_region
          %s241 = sand.u32 %s41, 1
          %s242 = scalar_lea.sflag [#allocation3], %s241
          %s243 = sand.u32 %s41, 1
          %s244 = smul.addr %s243, 8
          %s245 = scalar_lea.vmem [#allocation2], %s244
          %s247 = ssub.s32 128, 128
          %248 = vsyncadd %s242, %s247
          %s249 = smul.addr %s24, 3
          %s250 = sadd.s32 %s25, %s249
          %s251 = smul.addr %s250, 128
          %s252 = scalar_lea.hbm %s0, %s251
          %s254 = sshll.u32 %s245, 4
          %s255 = int_to_ptr.vmem [resolvable:$true] %s254
          %257 = dma.hbm_to_vmem [thread:$0]  %s252, 128, %s255, %s242
        $region36: #{tpu_custom_call.1} parent=31 // pred_fallthru
          _
      $region32: #{tpu_custom_call.1} parent=5 // pred_fallthru
        _
      %p258 = scmp.le.s32.totalorder 1, %s17
      %p259 = scmp.lt.s32.totalorder %s17, 7
      %p260 = pnand %p258, %p259
      %p261 = pneg %p260
      // Predicated region
      $region37: #{tpu_custom_call.1} parent=5 // pred_check
        _
      $region38: #{tpu_custom_call.1} parent=5 // pred_check_branch
        %263 = sbr.rel (%p260) target = $region40
      $region39: #{tpu_custom_call.1} parent=5 // pred_region
        %s264 = ssub.s32 %s17, 1
        %s265 = sand.u32 %s44, 1
        %s266 = scalar_lea.sflag [#allocation3], %s265
        %s267 = sand.u32 %s44, 1
        %s268 = smul.addr %s267, 8
        %s269 = scalar_lea.vmem [#allocation2], %s268
        // Predicated region
        $region41: #{tpu_custom_call.1} parent=39 // pred_check
          %p270 = pneg %p57
        $region42: #{tpu_custom_call.1} parent=39 // pred_check_branch
          %272 = sbr.rel (%p270) target = $region44
        $region43: #{tpu_custom_call.1} parent=39 // pred_region
          %273 = dma.done %s266, 128
        $region44: #{tpu_custom_call.1} parent=39 // pred_fallthru
          _
        // Predicated region
        $region45: #{tpu_custom_call.1} parent=39 // pred_check
          %p274 = pneg %p120
        $region46: #{tpu_custom_call.1} parent=39 // pred_check_branch
          %276 = sbr.rel (%p274) target = $region48
        $region47: #{tpu_custom_call.1} parent=39 // pred_region
          %277 = dma.done [#allocation5], 512
        $region48: #{tpu_custom_call.1} parent=39 // pred_fallthru
          _
        %s278 = sand.u32 %s44, 1
        %s279 = scalar_lea.sflag [#allocation3], %s278
        %s280 = sand.u32 %s44, 1
        %s281 = smul.addr %s280, 8
        %s282 = scalar_lea.vmem [#allocation2], %s281
        %p283 = pneg %p57
        %p284 = pneg %p54
        %p285 = pneg %p78
        %p286 = pneg %p75
        %p287 = pneg %p99
        %p288 = pneg %p96
        %p289 = pneg %p120
        %p290 = pneg %p117
        %p291 = pneg %p141
        %p292 = pneg %p138
        %p293 = pneg %p169
        %p294 = pneg %p166
        %s295 = sand.u32 %s156, 1
        %s296 = sand.u32 %s156, 1
        %s297 = smul.addr %s296, 16
        %s298 = scalar_lea.vmem [#allocation6], %s297
        %p299 = pneg %p197
        %p300 = pneg %p194
        %s301 = sand.u32 %s184, 1
        %s302 = sand.u32 %s184, 1
        %s303 = smul.addr %s302, 16
        %s304 = scalar_lea.vmem [#allocation7], %s303
        %v306 = vld [vmem:[%s269] sm:$0xff]
        %v307 = vld [vmem:[%s1] sm:$0x1]
        %v308 = vld [vmem:[%s2] sm:$0x1]
        %vm309 = vcmask 523264
        %v310 = vsel %vm309, %v306, 0.0
        %311 = vadd.xlane.f32.xlu0 %v310
        %v312 = vpop.xlane.xlu0 %311
        %v313 = vrcp.pop 64.0
        %v314 = vmul.f32 %v312, %v313
        %v315 = vmul.f32 %v306, %v306
        %v316 = vsel %vm309, %v315, 0.0
        %317 = vadd.xlane.f32.xlu0 %v316
        %v318 = vpop.xlane.xlu0 %317
        %v319 = vmul.f32 %v318, %v313
        %v320 = vmul.f32 %v314, %v314
        %v321 = vsub.f32 %v319, %v320
        %v322 = vsub.f32 %v306, %v314
        %v323 = vadd.f32 %v321, 1e-05
        %v324 = vrsqrt.pop %v323
        %v325 = vmul.f32 %v322, %v324
        %v327 = vlaneseq
        %v328 = vshrl.u32 %v327, 7
        %v329 = vsub.s32 0, %v328
        %v330 = vrot.slane %v307, %v329
        %v332 = vmul.f32 %v325, %v330
        %v334 = vlaneseq
        %v335 = vshrl.u32 %v334, 7
        %v336 = vsub.s32 0, %v335
        %v337 = vrot.slane %v308, %v336
        %v339 = vadd.f32 %v332, %v337
        %v340 = vpack.c.bf16 %v339, %v339
        %v341 = vld [vmem:[#allocation4] sm:$0xf]
        %v342 = vld [vmem:[#allocation4 + $0x4] sm:$0xf]
        %v343 = vld [vmem:[#allocation4 + $0x8] sm:$0xf]
        %v344 = vld [vmem:[#allocation4 + $0xc] sm:$0xf]
        %v345 = vld [vmem:[#allocation4 + $0x10] sm:$0xf]
        %v346 = vld [vmem:[#allocation4 + $0x14] sm:$0xf]
        %v347 = vld [vmem:[#allocation4 + $0x18] sm:$0xf]
        %v348 = vld [vmem:[#allocation4 + $0x1c] sm:$0xf]
        %v349 = vld [vmem:[%s4] sm:$0x1]
        %v351 = vlaneseq
        %v352 = vshrl.u32 %v351, 7
        %v353 = vsub.s32 0, %v352
        %v354 = vrot.slane %v349, %v353
        %v364 = vunpack.c.l.b16 %v341
        %v365 = vunpack.c.l.b16 %v342
        %v366 = vunpack.c.l.b16 %v343
        %v367 = vunpack.c.l.b16 %v344
        %v368 = vunpack.c.l.b16 %v345
        %v369 = vunpack.c.l.b16 %v346
        %v370 = vunpack.c.l.b16 %v347
        %v371 = vunpack.c.l.b16 %v348
        %v372 = vpack.c.b16 %v365, %v364
        %v373 = vpack.c.b16 %v367, %v366
        %v374 = vpack.c.b16 %v369, %v368
        %v375 = vpack.c.b16 %v371, %v370
        %v381 = vsel %vm309, %v340, 0
        %383 = vmatprep.subr.bf16.mxu0 0
        %384 = vmatpush1.bf16.msra.mxu0 %v372
        %385 = vmatprep.subr.bf16.mxu0 0
        %386 = vmatpush1.bf16.msra.mxu0 %v373
        %387 = vmatprep.subr.bf16.mxu0 0
        %388 = vmatpush1.bf16.msra.mxu0 %v374
        %389 = vmatprep.subr.bf16.mxu0 0
        %390 = vmatpush1.bf16.msra.mxu0 %v375
        %391 = vmatprep.subr.bf16.mxu0 0
        %392 = vmatpush1.bf16.msra.mxu0 0
        %393 = vmatprep.subr.bf16.mxu0 0
        %394 = vmatpush1.bf16.msra.mxu0 0
        %395 = vmatprep.subr.bf16.mxu0 0
        %396 = vmatpush1.bf16.msra.mxu0 0
        %397 = vmatprep.subr.bf16.mxu0 0
        %398 = vmatpush1.bf16.msra.mxu0 0
        %399 = vmatprep.subr.bf16.mxu0 0
        %400 = vmatpush1.bf16.msra.mxu0 0
        %401 = vmatprep.subr.bf16.mxu0 0
        %402 = vmatpush1.bf16.msra.mxu0 0
        %403 = vmatprep.subr.bf16.mxu0 0
        %404 = vmatpush1.bf16.msra.mxu0 0
        %405 = vmatprep.subr.bf16.mxu0 0
        %406 = vmatpush1.bf16.msra.mxu0 0
        %407 = vmatprep.subr.bf16.mxu0 0
        %408 = vmatpush1.bf16.msra.mxu0 0
        %409 = vmatprep.subr.bf16.mxu0 0
        %410 = vmatpush1.bf16.msra.mxu0 0
        %411 = vmatprep.subr.bf16.mxu0 0
        %412 = vmatpush1.bf16.msra.mxu0 0
        %413 = vmatprep.subr.bf16.mxu0 0
        %414 = vmatpush1.bf16.msra.mxu0 0
        %415 = vmatprep.mubr.bf16.mxu0 0
        %416 = vmatmul.mubr.bf16.gmra.mrb[0].mxu0 %v381
        %v417 = vpop.f32.mrb[0].mxu0
        %v418 = vadd.f32 %v354, %v417
        %v419 = vpop.f32.mrb[0].mxu0
        %v420 = vpop.f32.mrb[0].mxu0
        %v421 = vpop.f32.mrb[0].mxu0
        %422 = vdwg.mxu0
        %v423 = vpack.c.bf16 %v418, %v418
        %vm424 = vcmask 60416
        %425 = vst.msk [vmem:[%s298] sm:$0xf] %vm424, %v423
        %v427 = vunpack.c.l.b16 %v423
        %v428 = vpack.c.b16 %v427, %v427
        %429 = vrot.lane.b32.xlu0 %v428, 96
        %v430 = vpop.permute.xlu0 %429
        %432 = vst.msk [vmem:[%s304] sm:$0xf] %vm424, %v430
        %433 = vrot.lane.b32.xlu0 %v428, 120
        %v434 = vpop.permute.xlu0 %433
        %s436 = scalar_lea.vmem %s298, 4 [#allocation6]
        %437 = vst.msk [vmem:[%s436] sm:$0xf] %vm424, %v434
        %438 = vrot.lane.b32.xlu0 %v428, 88
        %v439 = vpop.permute.xlu0 %438
        %s441 = scalar_lea.vmem %s304, 4 [#allocation7]
        %442 = vst.msk [vmem:[%s441] sm:$0xf] %vm424, %v439
        %443 = vrot.lane.b32.xlu0 %v428, 112
        %v444 = vpop.permute.xlu0 %443
        %s446 = scalar_lea.vmem %s298, 8 [#allocation6]
        %447 = vst.msk [vmem:[%s446] sm:$0xf] %vm424, %v444
        %448 = vrot.lane.b32.xlu0 %v428, 80
        %v449 = vpop.permute.xlu0 %448
        %s451 = scalar_lea.vmem %s304, 8 [#allocation7]
        %452 = vst.msk [vmem:[%s451] sm:$0xf] %vm424, %v449
        %453 = vrot.lane.b32.xlu0 %v428, 104
        %v454 = vpop.permute.xlu0 %453
        %s456 = scalar_lea.vmem %s298, 12 [#allocation6]
        %457 = vst.msk [vmem:[%s456] sm:$0xf] %vm424, %v454
        %458 = vrot.lane.b32.xlu0 %v428, 72
        %v459 = vpop.permute.xlu0 %458
        %s461 = scalar_lea.vmem %s304, 12 [#allocation7]
        %462 = vst.msk [vmem:[%s461] sm:$0xf] %vm424, %v459
        %s463 = sand.u32 %s156, 1
        %s464 = sand.u32 %s156, 1
        %s465 = smul.addr %s464, 16
        %s466 = scalar_lea.vmem [#allocation6], %s465
        %s467 = sand.u32 %s184, 1
        %s468 = sand.u32 %s184, 1
        %s469 = smul.addr %s468, 16
        %s470 = scalar_lea.vmem [#allocation7], %s469
        // Predicated region
        $region49: #{tpu_custom_call.1} parent=39 // pred_check
          %p471 = pneg %p166
        $region50: #{tpu_custom_call.1} parent=39 // pred_check_branch
          %473 = sbr.rel (%p471) target = $region52
        $region51: #{tpu_custom_call.1} parent=39 // pred_region
          %s474 = smul.addr %s26, 12
          %s475 = sadd.s32 %s27, %s474
          %s476 = smul.addr %s475, 4
          %s477 = scalar_lea.vmem %s5, %s476
          // Predicated region
          $region53: #{tpu_custom_call.1} parent=51 // pred_check
            _
          $region54: #{tpu_custom_call.1} parent=51 // pred_check_branch
            %479 = sbr.rel (0) target = $region56
          $region55: #{tpu_custom_call.1} parent=51 // pred_region
            // Predicated region
            $region57: #{tpu_custom_call.1} parent=55 // pred_check
              _
            $region58: #{tpu_custom_call.1} parent=55 // pred_check_branch
              %481 = sbr.rel target = $region60
            $region59: #{tpu_custom_call.1} parent=55 // pred_region
              // Predicated region
              $region72: #{tpu_custom_call.1} parent=59 // pred_check
                _
              $region73: #{tpu_custom_call.1} parent=59 // pred_check_branch
                %502 = sbr.rel (0) target = $region75
              $region74: #{tpu_custom_call.1} parent=59 // pred_region
                loop: start=0, step=1, limit=1
                $region76: #{tpu_custom_call.1} parent=74 // loop_pre_header
                  _
                $region77: #{tpu_custom_call.1} parent=74 // loop_header
                  %s504 = sphi 0, %s508
                  %p505 = scmp.ge.s32.totalorder %s504, 1
                  %s509 = sphi %s466, %s466
                  %s510 = sphi %s477, %s477
                $region78: #{tpu_custom_call.1} parent=74 // loop_header_branch
                  %507 = sbr.rel (%p505) target = $region82
                $region79: #{tpu_custom_call.1} parent=74 // loop_body
                  _
                $region80: #{tpu_custom_call.1} parent=74 // loop_footer
                  %s508 = sadd.s32 1, %s504
                $region81: #{tpu_custom_call.1} parent=74 // loop_footer_branch
                  %503 = sbr.rel target = $region77
                $region82: #{tpu_custom_call.1} parent=74 // loop_exit
                  _
                loop: start=0, step=1, limit=1
                $region83: #{tpu_custom_call.1} parent=74 // loop_pre_header
                  _
                $region84: #{tpu_custom_call.1} parent=74 // loop_header
                  %s513 = sphi 0, %s517
                  %p514 = scmp.ge.s32.totalorder %s513, 1
                  %s518 = sphi %s466, %s466
                  %s519 = sphi %s477, %s477
                $region85: #{tpu_custom_call.1} parent=74 // loop_header_branch
                  %516 = sbr.rel (%p514) target = $region89
                $region86: #{tpu_custom_call.1} parent=74 // loop_body
                  %v520 = vld [vmem:[%s518] sm:$0xf]
                  %521 = vst [vmem:[%s519] sm:$0xf] %v520
                  %v522 = vld [vmem:[%s518 + $0x4] sm:$0xf]
                  %523 = vst [vmem:[%s519 + $0xc] sm:$0xf] %v522
                  %v524 = vld [vmem:[%s518 + $0x8] sm:$0xf]
                  %525 = vst [vmem:[%s519 + $0x18] sm:$0xf] %v524
                  %v526 = vld [vmem:[%s518 + $0xc] sm:$0xf]
                  %527 = vst [vmem:[%s519 + $0x24] sm:$0xf] %v526
                $region87: #{tpu_custom_call.1} parent=74 // loop_footer
                  %s517 = sadd.s32 1, %s513
                $region88: #{tpu_custom_call.1} parent=74 // loop_footer_branch
                  %512 = sbr.rel target = $region84
                $region89: #{tpu_custom_call.1} parent=74 // loop_exit
                  _
              $region75: #{tpu_custom_call.1} parent=59 // pred_fallthru
                _
            $region60: #{tpu_custom_call.1} parent=55 // pred_fallthru
              _
            // Predicated region
            $region61: #{tpu_custom_call.1} parent=55 // pred_check
              _
            $region62: #{tpu_custom_call.1} parent=55 // pred_check_branch
              %483 = sbr.rel (0) target = $region64
            $region63: #{tpu_custom_call.1} parent=55 // pred_region
              loop: start=0, step=1, limit=1
              $region65: #{tpu_custom_call.1} parent=63 // loop_pre_header
                _
              $region66: #{tpu_custom_call.1} parent=63 // loop_header
                %s486 = sphi 0, %s490
                %p487 = scmp.ge.s32.totalorder %s486, 1
                %s491 = sphi %s466, %s466
                %s492 = sphi %s477, %s477
              $region67: #{tpu_custom_call.1} parent=63 // loop_header_branch
                %489 = sbr.rel (%p487) target = $region71
              $region68: #{tpu_custom_call.1} parent=63 // loop_body
                %v493 = vld [vmem:[%s491] sm:$0xf]
                %494 = vst [vmem:[%s492] sm:$0xf] %v493
                %v495 = vld [vmem:[%s491 + $0x4] sm:$0xf]
                %496 = vst [vmem:[%s492 + $0xc] sm:$0xf] %v495
                %v497 = vld [vmem:[%s491 + $0x8] sm:$0xf]
                %498 = vst [vmem:[%s492 + $0x18] sm:$0xf] %v497
                %v499 = vld [vmem:[%s491 + $0xc] sm:$0xf]
                %500 = vst [vmem:[%s492 + $0x24] sm:$0xf] %v499
              $region69: #{tpu_custom_call.1} parent=63 // loop_footer
                %s490 = sadd.s32 1, %s486
              $region70: #{tpu_custom_call.1} parent=63 // loop_footer_branch
                %485 = sbr.rel target = $region66
              $region71: #{tpu_custom_call.1} parent=63 // loop_exit
                _
            $region64: #{tpu_custom_call.1} parent=55 // pred_fallthru
              _
          $region56: #{tpu_custom_call.1} parent=51 // pred_fallthru
            _
          %528 = vnop
        $region52: #{tpu_custom_call.1} parent=39 // pred_fallthru
          _
        // Predicated region
        $region90: #{tpu_custom_call.1} parent=39 // pred_check
          %p529 = pneg %p194
        $region91: #{tpu_custom_call.1} parent=39 // pred_check_branch
          %531 = sbr.rel (%p529) target = $region93
        $region92: #{tpu_custom_call.1} parent=39 // pred_region
          %s532 = smul.addr %s26, 12
          %s533 = sadd.s32 %s27, %s532
          %s534 = smul.addr %s533, 4
          %s535 = scalar_lea.vmem %s6, %s534
          // Predicated region
          $region94: #{tpu_custom_call.1} parent=92 // pred_check
            _
          $region95: #{tpu_custom_call.1} parent=92 // pred_check_branch
            %537 = sbr.rel (0) target = $region97
          $region96: #{tpu_custom_call.1} parent=92 // pred_region
            // Predicated region
            $region98: #{tpu_custom_call.1} parent=96 // pred_check
              _
            $region99: #{tpu_custom_call.1} parent=96 // pred_check_branch
              %539 = sbr.rel target = $region101
            $region100: #{tpu_custom_call.1} parent=96 // pred_region
              // Predicated region
              $region113: #{tpu_custom_call.1} parent=100 // pred_check
                _
              $region114: #{tpu_custom_call.1} parent=100 // pred_check_branch
                %560 = sbr.rel (0) target = $region116
              $region115: #{tpu_custom_call.1} parent=100 // pred_region
                loop: start=0, step=1, limit=1
                $region117: #{tpu_custom_call.1} parent=115 // loop_pre_header
                  _
                $region118: #{tpu_custom_call.1} parent=115 // loop_header
                  %s562 = sphi 0, %s566
                  %p563 = scmp.ge.s32.totalorder %s562, 1
                  %s567 = sphi %s470, %s470
                  %s568 = sphi %s535, %s535
                $region119: #{tpu_custom_call.1} parent=115 // loop_header_branch
                  %565 = sbr.rel (%p563) target = $region123
                $region120: #{tpu_custom_call.1} parent=115 // loop_body
                  _
                $region121: #{tpu_custom_call.1} parent=115 // loop_footer
                  %s566 = sadd.s32 1, %s562
                $region122: #{tpu_custom_call.1} parent=115 // loop_footer_branch
                  %561 = sbr.rel target = $region118
                $region123: #{tpu_custom_call.1} parent=115 // loop_exit
                  _
                loop: start=0, step=1, limit=1
                $region124: #{tpu_custom_call.1} parent=115 // loop_pre_header
                  _
                $region125: #{tpu_custom_call.1} parent=115 // loop_header
                  %s571 = sphi 0, %s575
                  %p572 = scmp.ge.s32.totalorder %s571, 1
                  %s576 = sphi %s470, %s470
                  %s577 = sphi %s535, %s535
                $region126: #{tpu_custom_call.1} parent=115 // loop_header_branch
                  %574 = sbr.rel (%p572) target = $region130
                $region127: #{tpu_custom_call.1} parent=115 // loop_body
                  %v578 = vld [vmem:[%s576] sm:$0xf]
                  %579 = vst [vmem:[%s577] sm:$0xf] %v578
                  %v580 = vld [vmem:[%s576 + $0x4] sm:$0xf]
                  %581 = vst [vmem:[%s577 + $0xc] sm:$0xf] %v580
                  %v582 = vld [vmem:[%s576 + $0x8] sm:$0xf]
                  %583 = vst [vmem:[%s577 + $0x18] sm:$0xf] %v582
                  %v584 = vld [vmem:[%s576 + $0xc] sm:$0xf]
                  %585 = vst [vmem:[%s577 + $0x24] sm:$0xf] %v584
                $region128: #{tpu_custom_call.1} parent=115 // loop_footer
                  %s575 = sadd.s32 1, %s571
                $region129: #{tpu_custom_call.1} parent=115 // loop_footer_branch
                  %570 = sbr.rel target = $region125
                $region130: #{tpu_custom_call.1} parent=115 // loop_exit
                  _
              $region116: #{tpu_custom_call.1} parent=100 // pred_fallthru
                _
            $region101: #{tpu_custom_call.1} parent=96 // pred_fallthru
              _
            // Predicated region
            $region102: #{tpu_custom_call.1} parent=96 // pred_check
              _
            $region103: #{tpu_custom_call.1} parent=96 // pred_check_branch
              %541 = sbr.rel (0) target = $region105
            $region104: #{tpu_custom_call.1} parent=96 // pred_region
              loop: start=0, step=1, limit=1
              $region106: #{tpu_custom_call.1} parent=104 // loop_pre_header
                _
              $region107: #{tpu_custom_call.1} parent=104 // loop_header
                %s544 = sphi 0, %s548
                %p545 = scmp.ge.s32.totalorder %s544, 1
                %s549 = sphi %s470, %s470
                %s550 = sphi %s535, %s535
              $region108: #{tpu_custom_call.1} parent=104 // loop_header_branch
                %547 = sbr.rel (%p545) target = $region112
              $region109: #{tpu_custom_call.1} parent=104 // loop_body
                %v551 = vld [vmem:[%s549] sm:$0xf]
                %552 = vst [vmem:[%s550] sm:$0xf] %v551
                %v553 = vld [vmem:[%s549 + $0x4] sm:$0xf]
                %554 = vst [vmem:[%s550 + $0xc] sm:$0xf] %v553
                %v555 = vld [vmem:[%s549 + $0x8] sm:$0xf]
                %556 = vst [vmem:[%s550 + $0x18] sm:$0xf] %v555
                %v557 = vld [vmem:[%s549 + $0xc] sm:$0xf]
                %558 = vst [vmem:[%s550 + $0x24] sm:$0xf] %v557
              $region110: #{tpu_custom_call.1} parent=104 // loop_footer
                %s548 = sadd.s32 1, %s544
              $region111: #{tpu_custom_call.1} parent=104 // loop_footer_branch
                %543 = sbr.rel target = $region107
              $region112: #{tpu_custom_call.1} parent=104 // loop_exit
                _
            $region105: #{tpu_custom_call.1} parent=96 // pred_fallthru
              _
          $region97: #{tpu_custom_call.1} parent=92 // pred_fallthru
            _
          %586 = vnop
        $region93: #{tpu_custom_call.1} parent=39 // pred_fallthru
          _
      $region40: #{tpu_custom_call.1} parent=5 // pred_fallthru
        _
      %p587 = scmp.le.s32.totalorder 2, %s17
      // Predicated region
      $region131: #{tpu_custom_call.1} parent=5 // pred_check
        %p588 = pneg %p587
      $region132: #{tpu_custom_call.1} parent=5 // pred_check_branch
        %590 = sbr.rel (%p588) target = $region134
      $region133: #{tpu_custom_call.1} parent=5 // pred_region
        %s591 = ssub.s32 %s17, 2
        // Predicated region
        $region135: #{tpu_custom_call.1} parent=133 // pred_check
          %p592 = pneg %p172
        $region136: #{tpu_custom_call.1} parent=133 // pred_check_branch
          %594 = sbr.rel (%p592) target = $region138
        $region137: #{tpu_custom_call.1} parent=133 // pred_region
          %s595 = sand.u32 %s157, 1
          %s596 = sand.u32 %s157, 1
          %s597 = smul.addr %s596, 16
          %s598 = scalar_lea.vmem [#allocation6], %s597
        $region138: #{tpu_custom_call.1} parent=133 // pred_fallthru
          _
        // Predicated region
        $region139: #{tpu_custom_call.1} parent=133 // pred_check
          %p599 = pneg %p200
        $region140: #{tpu_custom_call.1} parent=133 // pred_check_branch
          %601 = sbr.rel (%p599) target = $region142
        $region141: #{tpu_custom_call.1} parent=133 // pred_region
          %s602 = sand.u32 %s185, 1
          %s603 = sand.u32 %s185, 1
          %s604 = smul.addr %s603, 16
          %s605 = scalar_lea.vmem [#allocation7], %s604
        $region142: #{tpu_custom_call.1} parent=133 // pred_fallthru
          _
      $region134: #{tpu_custom_call.1} parent=5 // pred_fallthru
        _
    $region6: #{tpu_custom_call.1} parent=1 // loop_footer
      %s21 = sadd.s32 1, %s17
    $region7: #{tpu_custom_call.1} parent=1 // loop_footer_branch
      %16 = sbr.rel target = $region3
    $region8: #{tpu_custom_call.1} parent=1 // loop_exit
      _
    %606 = vsyncpa [#allocation3], 1
    %s607 = scalar_lea.sflag [#allocation3], 1
    %608 = vsyncpa %s607, 1
    %609 = vsyncpa [#allocation5], 1

// kernel: tpu_custom_call.1
$region0: #{tpu_custom_call.1}
  #allocation0 [shape = 'u32[]', space=smem, size = 0x4, offset = 0x4, fixed_abs, tag = 'smem constant byte address 0x4 - core index']
  #allocation1 [shape = 'u32[144,128]{1,0:T(1,128)}', space=vmem, size = 0x12000, scoped, tag = 'internal scratch']
  %s0 = inlined_call_operand.hbm [shape: f32[2,24,64], index: 0, kind: input, shape index: {}]
  %s1 = inlined_call_operand.vmem [shape: f32[1,64], index: 1, kind: input, shape index: {}]
  %s2 = inlined_call_operand.vmem [shape: f32[1,64], index: 2, kind: input, shape index: {}]
  %s3 = inlined_call_operand.hbm [shape: bf16[64,64], index: 3, kind: input, shape index: {}]
  %s4 = inlined_call_operand.vmem [shape: f32[1,64], index: 4, kind: input, shape index: {}]
  %s5 = inlined_call_operand.vmem [shape: bf16[2,4,24,8], index: 5, kind: output, shape index: {0}]
  %s6 = inlined_call_operand.vmem [shape: bf16[2,4,24,8], index: 6, kind: output, shape index: {1}]
  %7 = xla_tuple %s5, %s6
  %s8 = sld [smem:[#allocation0]]
  $region143: #{tpu_custom_call.1} parent=0
    _
  %s10 = ssub.s32 1, %s8
  %s11 = scalar_select 0, %s10, %s8
  $region1: #{tpu_custom_call.1} parent=0
    #allocation2 [shape = 'u8[8192]{0}', space=vmem, size = 0x2000, scoped, tag = 'input window, operand 0']
    #allocation3 [shape = 's32[2]{0}', space=sflag, size = 0x8, scoped, tag = 'scoped memory for tpu_custom_call.1']
    #allocation4 [shape = 'u8[16384]{0}', space=vmem, size = 0x4000, scoped, tag = 'input window, operand 3, single buffered']
    #allocation5 [shape = 's32[1]{0}', space=sflag, size = 0x4, scoped, tag = 'scoped memory for tpu_custom_call.1']
    #allocation6 [shape = 'u8[16384]{0}', space=vmem, size = 0x4000, scoped, tag = 'output window, operand 0']
    #allocation7 [shape = 'u8[16384]{0}', space=vmem, size = 0x4000, scoped, tag = 'output window, operand 1']
    %12 = vsyncpa [#allocation3], 0
    %s13 = scalar_lea.sflag [#allocation3], 1
    %14 = vsyncpa %s13, 0
    %15 = vsyncpa [#allocation5], 0
    loop: start=0, step=1, limit=8
    $region2: #{tpu_custom_call.1} parent=1 // loop_pre_header
      _
    $region3: #{tpu_custom_call.1} parent=1 // loop_header
      %s17 = sphi 0, %s21
      %p18 = scmp.ge.s32.totalorder %s17, 8
      %s24 = sphi 0, %s36
      %s25 = sphi 0, %s32
      %s26 = sphi 0, %s24
      %s27 = sphi 0, %s25
      %s28 = sphi 0, %s26
      %s29 = sphi 0, %s27
      %s41 = sphi 0, %s43
      %s44 = sphi 0, %s41
      %s45 = sphi 0, %s44
      %s61 = sphi 0, %s45
      %s65 = sphi 0, %s65
      %s67 = sphi 0, %s65
      %s68 = sphi 0, %s67
      %s82 = sphi 0, %s68
      %s86 = sphi 0, %s86
      %s88 = sphi 0, %s86
      %s89 = sphi 0, %s88
      %s103 = sphi 0, %s89
      %s107 = sphi 0, %s107
      %s109 = sphi 0, %s107
      %s110 = sphi 0, %s109
      %s124 = sphi 0, %s110
      %s128 = sphi 0, %s128
      %s130 = sphi 0, %s128
      %s131 = sphi 0, %s130
      %s145 = sphi 0, %s131
      %s153 = sphi 0, %s155
      %s156 = sphi 0, %s153
      %s157 = sphi 0, %s156
      %s173 = sphi 0, %s157
      %s181 = sphi 0, %s183
      %s184 = sphi 0, %s181
      %s185 = sphi 0, %s184
      %s201 = sphi 0, %s185
    $region4: #{tpu_custom_call.1} parent=1 // loop_header_branch
      %20 = sbr.rel (%p18) target = $region8
    $region5: #{tpu_custom_call.1} parent=1 // loop_body
      %s22 = ssub.s32 %s17, 1
      %s23 = ssub.s32 %s17, 2
      %s30 = sadd.s32 1, %s25
      %p31 = scmp.ge.s32.totalorder %s30, 3
      %s32 = scalar_select %p31, 0, %s30
      %s33 = sadd.s32 1, %s24
      %s34 = scalar_select %p31, %s33, %s24
      %p35 = scmp.ge.s32.totalorder %s34, 2
      %s36 = scalar_select %p35, 0, %s34
      %s37 = ssub.s32 %s24, %s36
      %s38 = ssub.s32 %s25, %s32
      %s39 = sor.u32 %s37, %s38
      %p40 = scmp.eq.s32.totalorder %s39, 0
      %s42 = sadd.s32 %s41, 1
      %s43 = scalar_select %p40, %s41, %s42
      %p46 = pneg %p40
      %p47 = scmp.eq.s32.totalorder %s17, 5
      %p48 = por %p46, %p47
      %p49 = scmp.ne.s32.totalorder %s41, %s44
      %p50 = scmp.eq.s32.totalorder %s17, 0
      %p51 = por %p49, %p50
      %p52 = scmp.ne.s32.totalorder %s41, %s44
      %p53 = scmp.eq.s32.totalorder %s22, 5
      %p54 = por %p52, %p53
      %p55 = scmp.ne.s32.totalorder %s44, %s45
      %p56 = scmp.eq.s32.totalorder %s22, 0
      %p57 = por %p55, %p56
      %p58 = scmp.ne.s32.totalorder %s44, %s45
      %p59 = scmp.eq.s32.totalorder %s23, 5
      %p60 = por %p58, %p59
      %p62 = scmp.ne.s32.totalorder %s45, %s61
      %p63 = scmp.eq.s32.totalorder %s23, 0
      %p64 = por %p62, %p63
      %s66 = sadd.s32 %s65, 1
      %p69 = scmp.eq.s32.totalorder %s17, 5
      %p70 = scmp.ne.s32.totalorder %s65, %s67
      %p71 = scmp.eq.s32.totalorder %s17, 0
      %p72 = por %p70, %p71
      %p73 = scmp.ne.s32.totalorder %s65, %s67
      %p74 = scmp.eq.s32.totalorder %s22, 5
      %p75 = por %p73, %p74
      %p76 = scmp.ne.s32.totalorder %s67, %s68
      %p77 = scmp.eq.s32.totalorder %s22, 0
      %p78 = por %p76, %p77
      %p79 = scmp.ne.s32.totalorder %s67, %s68
      %p80 = scmp.eq.s32.totalorder %s23, 5
      %p81 = por %p79, %p80
      %p83 = scmp.ne.s32.totalorder %s68, %s82
      %p84 = scmp.eq.s32.totalorder %s23, 0
      %p85 = por %p83, %p84
      %s87 = sadd.s32 %s86, 1
      %p90 = scmp.eq.s32.totalorder %s17, 5
      %p91 = scmp.ne.s32.totalorder %s86, %s88
      %p92 = scmp.eq.s32.totalorder %s17, 0
      %p93 = por %p91, %p92
      %p94 = scmp.ne.s32.totalorder %s86, %s88
      %p95 = scmp.eq.s32.totalorder %s22, 5
      %p96 = por %p94, %p95
      %p97 = scmp.ne.s32.totalorder %s88, %s89
      %p98 = scmp.eq.s32.totalorder %s22, 0
      %p99 = por %p97, %p98
      %p100 = scmp.ne.s32.totalorder %s88, %s89
      %p101 = scmp.eq.s32.totalorder %s23, 5
      %p102 = por %p100, %p101
      %p104 = scmp.ne.s32.totalorder %s89, %s103
      %p105 = scmp.eq.s32.totalorder %s23, 0
      %p106 = por %p104, %p105
      %s108 = sadd.s32 %s107, 1
      %p111 = scmp.eq.s32.totalorder %s17, 5
      %p112 = scmp.ne.s32.totalorder %s107, %s109
      %p113 = scmp.eq.s32.totalorder %s17, 0
      %p114 = por %p112, %p113
      %p115 = scmp.ne.s32.totalorder %s107, %s109
      %p116 = scmp.eq.s32.totalorder %s22, 5
      %p117 = por %p115, %p116
      %p118 = scmp.ne.s32.totalorder %s109, %s110
      %p119 = scmp.eq.s32.totalorder %s22, 0
      %p120 = por %p118, %p119
      %p121 = scmp.ne.s32.totalorder %s109, %s110
      %p122 = scmp.eq.s32.totalorder %s23, 5
      %p123 = por %p121, %p122
      %p125 = scmp.ne.s32.totalorder %s110, %s124
      %p126 = scmp.eq.s32.totalorder %s23, 0
      %p127 = por %p125, %p126
      %s129 = sadd.s32 %s128, 1
      %p132 = scmp.eq.s32.totalorder %s17, 5
      %p133 = scmp.ne.s32.totalorder %s128, %s130
      %p134 = scmp.eq.s32.totalorder %s17, 0
      %p135 = por %p133, %p134
      %p136 = scmp.ne.s32.totalorder %s128, %s130
      %p137 = scmp.eq.s32.totalorder %s22, 5
      %p138 = por %p136, %p137
      %p139 = scmp.ne.s32.totalorder %s130, %s131
      %p140 = scmp.eq.s32.totalorder %s22, 0
      %p141 = por %p139, %p140
      %p142 = scmp.ne.s32.totalorder %s130, %s131
      %p143 = scmp.eq.s32.totalorder %s23, 5
      %p144 = por %p142, %p143
      %p146 = scmp.ne.s32.totalorder %s131, %s145
      %p147 = scmp.eq.s32.totalorder %s23, 0
      %p148 = por %p146, %p147
      %s149 = ssub.s32 %s24, %s36
      %s150 = ssub.s32 %s25, %s32
      %s151 = sor.u32 %s149, %s150
      %p152 = scmp.eq.s32.totalorder %s151, 0
      %s154 = sadd.s32 %s153, 1
      %s155 = scalar_select %p152, %s153, %s154
      %p158 = pneg %p152
      %p159 = scmp.eq.s32.totalorder %s17, 5
      %p160 = por %p158, %p159
      %p161 = scmp.ne.s32.totalorder %s153, %s156
      %p162 = scmp.eq.s32.totalorder %s17, 0
      %p163 = por %p161, %p162
      %p164 = scmp.ne.s32.totalorder %s153, %s156
      %p165 = scmp.eq.s32.totalorder %s22, 5
      %p166 = por %p164, %p165
      %p167 = scmp.ne.s32.totalorder %s156, %s157
      %p168 = scmp.eq.s32.totalorder %s22, 0
      %p169 = por %p167, %p168
      %p170 = scmp.ne.s32.totalorder %s156, %s157
      %p171 = scmp.eq.s32.totalorder %s23, 5
      %p172 = por %p170, %p171
      %p174 = scmp.ne.s32.totalorder %s157, %s173
      %p175 = scmp.eq.s32.totalorder %s23, 0
      %p176 = por %p174, %p175
      %s177 = ssub.s32 %s24, %s36
      %s178 = ssub.s32 %s25, %s32
      %s179 = sor.u32 %s177, %s178
      %p180 = scmp.eq.s32.totalorder %s179, 0
      %s182 = sadd.s32 %s181, 1
      %s183 = scalar_select %p180, %s181, %s182
      %p186 = pneg %p180
      %p187 = scmp.eq.s32.totalorder %s17, 5
      %p188 = por %p186, %p187
      %p189 = scmp.ne.s32.totalorder %s181, %s184
      %p190 = scmp.eq.s32.totalorder %s17, 0
      %p191 = por %p189, %p190
      %p192 = scmp.ne.s32.totalorder %s181, %s184
      %p193 = scmp.eq.s32.totalorder %s22, 5
      %p194 = por %p192, %p193
      %p195 = scmp.ne.s32.totalorder %s184, %s185
      %p196 = scmp.eq.s32.totalorder %s22, 0
      %p197 = por %p195, %p196
      %p198 = scmp.ne.s32.totalorder %s184, %s185
      %p199 = scmp.eq.s32.totalorder %s23, 5
      %p200 = por %p198, %p199
      %p202 = scmp.ne.s32.totalorder %s185, %s201
      %p203 = scmp.eq.s32.totalorder %s23, 0
      %p204 = por %p202, %p203
      %p205 = scmp.le.s32.totalorder 1, %s17
      %p206 = scmp.lt.s32.totalorder %s17, 7
      %p207 = pnand %p205, %p206
      %p208 = pneg %p207
      // Predicated region
      $region9: #{tpu_custom_call.1} parent=5 // pred_check
        _
      $region10: #{tpu_custom_call.1} parent=5 // pred_check_branch
        %210 = sbr.rel (%p207) target = $region12
      $region11: #{tpu_custom_call.1} parent=5 // pred_region
        %s211 = ssub.s32 %s17, 1
        // Predicated region
        $region13: #{tpu_custom_call.1} parent=11 // pred_check
          %p212 = pneg %p78
        $region14: #{tpu_custom_call.1} parent=11 // pred_check_branch
          %214 = sbr.rel (%p212) target = $region16
        $region15: #{tpu_custom_call.1} parent=11 // pred_region
          _
        $region16: #{tpu_custom_call.1} parent=11 // pred_fallthru
          _
        // Predicated region
        $region17: #{tpu_custom_call.1} parent=11 // pred_check
          %p215 = pneg %p99
        $region18: #{tpu_custom_call.1} parent=11 // pred_check_branch
          %217 = sbr.rel (%p215) target = $region20
        $region19: #{tpu_custom_call.1} parent=11 // pred_region
          _
        $region20: #{tpu_custom_call.1} parent=11 // pred_fallthru
          _
        // Predicated region
        $region21: #{tpu_custom_call.1} parent=11 // pred_check
          %p218 = pneg %p120
        $region22: #{tpu_custom_call.1} parent=11 // pred_check_branch
          %220 = sbr.rel (%p218) target = $region24
        $region23: #{tpu_custom_call.1} parent=11 // pred_region
          %s222 = ssub.s32 512, 512
          %223 = vsyncadd [#allocation5], %s222
          %s224 = sshll.u32 [#allocation4], 4
          %s225 = int_to_ptr.vmem [resolvable:$true] %s224
          %230 = dma.hbm_to_vmem [thread:$0]  %s3, 512, %s225, [#allocation5], 64, 64, 4
        $region24: #{tpu_custom_call.1} parent=11 // pred_fallthru
          _
        // Predicated region
        $region25: #{tpu_custom_call.1} parent=11 // pred_check
          %p231 = pneg %p141
        $region26: #{tpu_custom_call.1} parent=11 // pred_check_branch
          %233 = sbr.rel (%p231) target = $region28
        $region27: #{tpu_custom_call.1} parent=11 // pred_region
          _
        $region28: #{tpu_custom_call.1} parent=11 // pred_fallthru
          _
      $region12: #{tpu_custom_call.1} parent=5 // pred_fallthru
        _
      %p234 = scmp.lt.s32.totalorder %s17, 6
      // Predicated region
      $region29: #{tpu_custom_call.1} parent=5 // pred_check
        %p235 = pneg %p234
      $region30: #{tpu_custom_call.1} parent=5 // pred_check_branch
        %237 = sbr.rel (%p235) target = $region32
      $region31: #{tpu_custom_call.1} parent=5 // pred_region
        // Predicated region
        $region33: #{tpu_custom_call.1} parent=31 // pred_check
          %p238 = pneg %p51
        $region34: #{tpu_custom_call.1} parent=31 // pred_check_branch
          %240 = sbr.rel (%p238) target = $region36
        $region35: #{tpu_custom_call.1} parent=31 // pred_region
          %s241 = sand.u32 %s41, 1
          %s242 = scalar_lea.sflag [#allocation3], %s241
          %s243 = sand.u32 %s41, 1
          %s244 = smul.addr %s243, 8
          %s245 = scalar_lea.vmem [#allocation2], %s244
          %s247 = ssub.s32 128, 128
          %248 = vsyncadd %s242, %s247
          %s249 = smul.addr %s24, 3
          %s250 = sadd.s32 %s25, %s249
          %s251 = smul.addr %s250, 128
          %s252 = scalar_lea.hbm %s0, %s251
          %s254 = sshll.u32 %s245, 4
          %s255 = int_to_ptr.vmem [resolvable:$true] %s254
          %257 = dma.hbm_to_vmem [thread:$0]  %s252, 128, %s255, %s242
        $region36: #{tpu_custom_call.1} parent=31 // pred_fallthru
          _
      $region32: #{tpu_custom_call.1} parent=5 // pred_fallthru
        _
      %p258 = scmp.le.s32.totalorder 1, %s17
      %p259 = scmp.lt.s32.totalorder %s17, 7
      %p260 = pnand %p258, %p259
      %p261 = pneg %p260
      // Predicated region
      $region37: #{tpu_custom_call.1} parent=5 // pred_check
        _
      $region38: #{tpu_custom_call.1} parent=5 // pred_check_branch
        %263 = sbr.rel (%p260) target = $region40
      $region39: #{tpu_custom_call.1} parent=5 // pred_region
        %s264 = ssub.s32 %s17, 1
        %s265 = sand.u32 %s44, 1
        %s266 = scalar_lea.sflag [#allocation3], %s265
        %s267 = sand.u32 %s44, 1
        %s268 = smul.addr %s267, 8
        %s269 = scalar_lea.vmem [#allocation2], %s268
        // Predicated region
        $region41: #{tpu_custom_call.1} parent=39 // pred_check
          %p270 = pneg %p57
        $region42: #{tpu_custom_call.1} parent=39 // pred_check_branch
          %272 = sbr.rel (%p270) target = $region44
        $region43: #{tpu_custom_call.1} parent=39 // pred_region
          %273 = dma.done %s266, 128
        $region44: #{tpu_custom_call.1} parent=39 // pred_fallthru
          _
        // Predicated region
        $region45: #{tpu_custom_call.1} parent=39 // pred_check
          %p274 = pneg %p120
        $region46: #{tpu_custom_call.1} parent=39 // pred_check_branch
          %276 = sbr.rel (%p274) target = $region48
        $region47: #{tpu_custom_call.1} parent=39 // pred_region
          %277 = dma.done [#allocation5], 512
        $region48: #{tpu_custom_call.1} parent=39 // pred_fallthru
          _
        %s278 = sand.u32 %s44, 1
        %s279 = scalar_lea.sflag [#allocation3], %s278
        %s280 = sand.u32 %s44, 1
        %s281 = smul.addr %s280, 8
        %s282 = scalar_lea.vmem [#allocation2], %s281
        %p283 = pneg %p57
        %p284 = pneg %p54
        %p285 = pneg %p78
        %p286 = pneg %p75
        %p287 = pneg %p99
        %p288 = pneg %p96
        %p289 = pneg %p120
        %p290 = pneg %p117
        %p291 = pneg %p141
        %p292 = pneg %p138
        %p293 = pneg %p169
        %p294 = pneg %p166
        %s295 = sand.u32 %s156, 1
        %s296 = sand.u32 %s156, 1
        %s297 = smul.addr %s296, 16
        %s298 = scalar_lea.vmem [#allocation6], %s297
        %p299 = pneg %p197
        %p300 = pneg %p194
        %s301 = sand.u32 %s184, 1
        %s302 = sand.u32 %s184, 1
        %s303 = smul.addr %s302, 16
        %s304 = scalar_lea.vmem [#allocation7], %s303
        %v306 = vld [vmem:[%s269] sm:$0xff]
        %v307 = vld [vmem:[%s1] sm:$0x1]
        %v308 = vld [vmem:[%s2] sm:$0x1]
        %vm309 = vcmask 523264
        %v310 = vsel %vm309, %v306, 0.0
        %311 = vadd.xlane.f32.xlu0 %v310
        %v312 = vpop.xlane.xlu0 %311
        %v313 = vrcp.pop 64.0
        %v314 = vmul.f32 %v312, %v313
        %v315 = vmul.f32 %v306, %v306
        %v316 = vsel %vm309, %v315, 0.0
        %317 = vadd.xlane.f32.xlu0 %v316
        %v318 = vpop.xlane.xlu0 %317
        %v319 = vmul.f32 %v318, %v313
        %v320 = vmul.f32 %v314, %v314
        %v321 = vsub.f32 %v319, %v320
        %v322 = vsub.f32 %v306, %v314
        %v323 = vadd.f32 %v321, 1e-05
        %v324 = vrsqrt.pop %v323
        %v325 = vmul.f32 %v322, %v324
        %v327 = vlaneseq
        %v328 = vshrl.u32 %v327, 7
        %v329 = vsub.s32 0, %v328
        %v330 = vrot.slane %v307, %v329
        %v332 = vmul.f32 %v325, %v330
        %v334 = vlaneseq
        %v335 = vshrl.u32 %v334, 7
        %v336 = vsub.s32 0, %v335
        %v337 = vrot.slane %v308, %v336
        %v339 = vadd.f32 %v332, %v337
        %v340 = vpack.c.bf16 %v339, %v339
        %v341 = vld [vmem:[#allocation4] sm:$0xf]
        %v342 = vld [vmem:[#allocation4 + $0x4] sm:$0xf]
        %v343 = vld [vmem:[#allocation4 + $0x8] sm:$0xf]
        %v344 = vld [vmem:[#allocation4 + $0xc] sm:$0xf]
        %v345 = vld [vmem:[#allocation4 + $0x10] sm:$0xf]
        %v346 = vld [vmem:[#allocation4 + $0x14] sm:$0xf]
        %v347 = vld [vmem:[#allocation4 + $0x18] sm:$0xf]
        %v348 = vld [vmem:[#allocation4 + $0x1c] sm:$0xf]
        %v349 = vld [vmem:[%s4] sm:$0x1]
        %v351 = vlaneseq
        %v352 = vshrl.u32 %v351, 7
        %v353 = vsub.s32 0, %v352
        %v354 = vrot.slane %v349, %v353
        %v364 = vunpack.c.l.b16 %v341
        %v365 = vunpack.c.l.b16 %v342
        %v366 = vunpack.c.l.b16 %v343
        %v367 = vunpack.c.l.b16 %v344
        %v368 = vunpack.c.l.b16 %v345
        %v369 = vunpack.c.l.b16 %v346
        %v370 = vunpack.c.l.b16 %v347
        %v371 = vunpack.c.l.b16 %v348
        %v372 = vpack.c.b16 %v365, %v364
        %v373 = vpack.c.b16 %v367, %v366
        %v374 = vpack.c.b16 %v369, %v368
        %v375 = vpack.c.b16 %v371, %v370
        %v381 = vsel %vm309, %v340, 0
        %383 = vmatprep.subr.bf16.mxu0 0
        %384 = vmatpush1.bf16.msra.mxu0 %v372
        %385 = vmatprep.subr.bf16.mxu0 0
        %386 = vmatpush1.bf16.msra.mxu0 %v373
        %387 = vmatprep.subr.bf16.mxu0 0
        %388 = vmatpush1.bf16.msra.mxu0 %v374
        %389 = vmatprep.subr.bf16.mxu0 0
        %390 = vmatpush1.bf16.msra.mxu0 %v375
        %391 = vmatprep.subr.bf16.mxu0 0
        %392 = vmatpush1.bf16.msra.mxu0 0
        %393 = vmatprep.subr.bf16.mxu0 0
        %394 = vmatpush1.bf16.msra.mxu0 0
        %395 = vmatprep.subr.bf16.mxu0 0
        %396 = vmatpush1.bf16.msra.mxu0 0
        %397 = vmatprep.subr.bf16.mxu0 0
        %398 = vmatpush1.bf16.msra.mxu0 0
        %399 = vmatprep.subr.bf16.mxu0 0
        %400 = vmatpush1.bf16.msra.mxu0 0
        %401 = vmatprep.subr.bf16.mxu0 0
        %402 = vmatpush1.bf16.msra.mxu0 0
        %403 = vmatprep.subr.bf16.mxu0 0
        %404 = vmatpush1.bf16.msra.mxu0 0
        %405 = vmatprep.subr.bf16.mxu0 0
        %406 = vmatpush1.bf16.msra.mxu0 0
        %407 = vmatprep.subr.bf16.mxu0 0
        %408 = vmatpush1.bf16.msra.mxu0 0
        %409 = vmatprep.subr.bf16.mxu0 0
        %410 = vmatpush1.bf16.msra.mxu0 0
        %411 = vmatprep.subr.bf16.mxu0 0
        %412 = vmatpush1.bf16.msra.mxu0 0
        %413 = vmatprep.subr.bf16.mxu0 0
        %414 = vmatpush1.bf16.msra.mxu0 0
        %415 = vmatprep.mubr.bf16.mxu0 0
        %416 = vmatmul.mubr.bf16.gmra.mrb[0].mxu0 %v381
        %v417 = vpop.f32.mrb[0].mxu0
        %v418 = vadd.f32 %v354, %v417
        %v419 = vpop.f32.mrb[0].mxu0
        %v420 = vpop.f32.mrb[0].mxu0
        %v421 = vpop.f32.mrb[0].mxu0
        %422 = vdwg.mxu0
        %v423 = vpack.c.bf16 %v418, %v418
        %vm424 = vcmask 60416
        %425 = vst.msk [vmem:[%s298] sm:$0xf] %vm424, %v423
        %v427 = vunpack.c.l.b16 %v423
        %v428 = vpack.c.b16 %v427, %v427
        %429 = vrot.lane.b32.xlu0 %v428, 96
        %v430 = vpop.permute.xlu0 %429
        %432 = vst.msk [vmem:[%s304] sm:$0xf] %vm424, %v430
        %433 = vrot.lane.b32.xlu0 %v428, 120
        %v434 = vpop.permute.xlu0 %433
        %s436 = scalar_lea.vmem %s298, 4 [#allocation6]
        %437 = vst.msk [vmem:[%s436] sm:$0xf] %vm424, %v434
        %438 = vrot.lane.b32.xlu0 %v428, 88
        %v439 = vpop.permute.xlu0 %438
        %s441 = scalar_lea.vmem %s304, 4 [#allocation7]
        %442 = vst.msk [vmem:[%s441] sm:$0xf] %vm424, %v439
        %443 = vrot.lane.b32.xlu0 %v428, 112
        %v444 = vpop.permute.xlu0 %443
        %s446 = scalar_lea.vmem %s298, 8 [#allocation6]
        %447 = vst.msk [vmem:[%s446] sm:$0xf] %vm424, %v444
        %448 = vrot.lane.b32.xlu0 %v428, 80
        %v449 = vpop.permute.xlu0 %448
        %s451 = scalar_lea.vmem %s304, 8 [#allocation7]
        %452 = vst.msk [vmem:[%s451] sm:$0xf] %vm424, %v449
        %453 = vrot.lane.b32.xlu0 %v428, 104
        %v454 = vpop.permute.xlu0 %453
        %s456 = scalar_lea.vmem %s298, 12 [#allocation6]
        %457 = vst.msk [vmem:[%s456] sm:$0xf] %vm424, %v454
        %458 = vrot.lane.b32.xlu0 %v428, 72
        %v459 = vpop.permute.xlu0 %458
        %s461 = scalar_lea.vmem %s304, 12 [#allocation7]
        %462 = vst.msk [vmem:[%s461] sm:$0xf] %vm424, %v459
        %s463 = sand.u32 %s156, 1
        %s464 = sand.u32 %s156, 1
        %s465 = smul.addr %s464, 16
        %s466 = scalar_lea.vmem [#allocation6], %s465
        %s467 = sand.u32 %s184, 1
        %s468 = sand.u32 %s184, 1
        %s469 = smul.addr %s468, 16
        %s470 = scalar_lea.vmem [#allocation7], %s469
        // Predicated region
        $region49: #{tpu_custom_call.1} parent=39 // pred_check
          %p471 = pneg %p166
        $region50: #{tpu_custom_call.1} parent=39 // pred_check_branch
          %473 = sbr.rel (%p471) target = $region52
        $region51: #{tpu_custom_call.1} parent=39 // pred_region
          %s474 = smul.addr %s26, 12
          %s475 = sadd.s32 %s27, %s474
          %s476 = smul.addr %s475, 4
          %s477 = scalar_lea.vmem %s5, %s476
          // Predicated region
          $region53: #{tpu_custom_call.1} parent=51 // pred_check
            _
          $region54: #{tpu_custom_call.1} parent=51 // pred_check_branch
            %479 = sbr.rel (0) target = $region56
          $region55: #{tpu_custom_call.1} parent=51 // pred_region
            // Predicated region
            $region57: #{tpu_custom_call.1} parent=55 // pred_check
              _
            $region58: #{tpu_custom_call.1} parent=55 // pred_check_branch
              %481 = sbr.rel target = $region60
            $region59: #{tpu_custom_call.1} parent=55 // pred_region
              // Predicated region
              $region72: #{tpu_custom_call.1} parent=59 // pred_check
                _
              $region73: #{tpu_custom_call.1} parent=59 // pred_check_branch
                %502 = sbr.rel (0) target = $region75
              $region74: #{tpu_custom_call.1} parent=59 // pred_region
                loop: start=0, step=1, limit=1
                $region76: #{tpu_custom_call.1} parent=74 // loop_pre_header
                  _
                $region77: #{tpu_custom_call.1} parent=74 // loop_header
                  %s504 = sphi 0, %s508
                  %p505 = scmp.ge.s32.totalorder %s504, 1
                  %s509 = sphi %s466, %s466
                  %s510 = sphi %s477, %s477
                $region78: #{tpu_custom_call.1} parent=74 // loop_header_branch
                  %507 = sbr.rel (%p505) target = $region82
                $region79: #{tpu_custom_call.1} parent=74 // loop_body
                  _
                $region80: #{tpu_custom_call.1} parent=74 // loop_footer
                  %s508 = sadd.s32 1, %s504
                $region81: #{tpu_custom_call.1} parent=74 // loop_footer_branch
                  %503 = sbr.rel target = $region77
                $region82: #{tpu_custom_call.1} parent=74 // loop_exit
                  _
                loop: start=0, step=1, limit=1
                $region83: #{tpu_custom_call.1} parent=74 // loop_pre_header
                  _
                $region84: #{tpu_custom_call.1} parent=74 // loop_header
                  %s513 = sphi 0, %s517
                  %p514 = scmp.ge.s32.totalorder %s513, 1
                  %s518 = sphi %s466, %s466
                  %s519 = sphi %s477, %s477
                $region85: #{tpu_custom_call.1} parent=74 // loop_header_branch
                  %516 = sbr.rel (%p514) target = $region89
                $region86: #{tpu_custom_call.1} parent=74 // loop_body
                  %v520 = vld [vmem:[%s518] sm:$0xf]
                  %521 = vst [vmem:[%s519] sm:$0xf] %v520
                  %v522 = vld [vmem:[%s518 + $0x4] sm:$0xf]
                  %523 = vst [vmem:[%s519 + $0xc] sm:$0xf] %v522
                  %v524 = vld [vmem:[%s518 + $0x8] sm:$0xf]
                  %525 = vst [vmem:[%s519 + $0x18] sm:$0xf] %v524
                  %v526 = vld [vmem:[%s518 + $0xc] sm:$0xf]
                  %527 = vst [vmem:[%s519 + $0x24] sm:$0xf] %v526
                $region87: #{tpu_custom_call.1} parent=74 // loop_footer
                  %s517 = sadd.s32 1, %s513
                $region88: #{tpu_custom_call.1} parent=74 // loop_footer_branch
                  %512 = sbr.rel target = $region84
                $region89: #{tpu_custom_call.1} parent=74 // loop_exit
                  _
              $region75: #{tpu_custom_call.1} parent=59 // pred_fallthru
                _
            $region60: #{tpu_custom_call.1} parent=55 // pred_fallthru
              _
            // Predicated region
            $region61: #{tpu_custom_call.1} parent=55 // pred_check
              _
            $region62: #{tpu_custom_call.1} parent=55 // pred_check_branch
              %483 = sbr.rel (0) target = $region64
            $region63: #{tpu_custom_call.1} parent=55 // pred_region
              loop: start=0, step=1, limit=1
              $region65: #{tpu_custom_call.1} parent=63 // loop_pre_header
                _
              $region66: #{tpu_custom_call.1} parent=63 // loop_header
                %s486 = sphi 0, %s490
                %p487 = scmp.ge.s32.totalorder %s486, 1
                %s491 = sphi %s466, %s466
                %s492 = sphi %s477, %s477
              $region67: #{tpu_custom_call.1} parent=63 // loop_header_branch
                %489 = sbr.rel (%p487) target = $region71
              $region68: #{tpu_custom_call.1} parent=63 // loop_body
                %v493 = vld [vmem:[%s491] sm:$0xf]
                %494 = vst [vmem:[%s492] sm:$0xf] %v493
                %v495 = vld [vmem:[%s491 + $0x4] sm:$0xf]
                %496 = vst [vmem:[%s492 + $0xc] sm:$0xf] %v495
                %v497 = vld [vmem:[%s491 + $0x8] sm:$0xf]
                %498 = vst [vmem:[%s492 + $0x18] sm:$0xf] %v497
                %v499 = vld [vmem:[%s491 + $0xc] sm:$0xf]
                %500 = vst [vmem:[%s492 + $0x24] sm:$0xf] %v499
              $region69: #{tpu_custom_call.1} parent=63 // loop_footer
                %s490 = sadd.s32 1, %s486
              $region70: #{tpu_custom_call.1} parent=63 // loop_footer_branch
                %485 = sbr.rel target = $region66
              $region71: #{tpu_custom_call.1} parent=63 // loop_exit
                _
            $region64: #{tpu_custom_call.1} parent=55 // pred_fallthru
              _
          $region56: #{tpu_custom_call.1} parent=51 // pred_fallthru
            _
          %528 = vnop
        $region52: #{tpu_custom_call.1} parent=39 // pred_fallthru
          _
        // Predicated region
        $region90: #{tpu_custom_call.1} parent=39 // pred_check
          %p529 = pneg %p194
        $region91: #{tpu_custom_call.1} parent=39 // pred_check_branch
          %531 = sbr.rel (%p529) target = $region93
        $region92: #{tpu_custom_call.1} parent=39 // pred_region
          %s532 = smul.addr %s26, 12
          %s533 = sadd.s32 %s27, %s532
          %s534 = smul.addr %s533, 4
          %s535 = scalar_lea.vmem %s6, %s534
          // Predicated region
          $region94: #{tpu_custom_call.1} parent=92 // pred_check
            _
          $region95: #{tpu_custom_call.1} parent=92 // pred_check_branch
            %537 = sbr.rel (0) target = $region97
          $region96: #{tpu_custom_call.1} parent=92 // pred_region
            // Predicated region
            $region98: #{tpu_custom_call.1} parent=96 // pred_check
              _
            $region99: #{tpu_custom_call.1} parent=96 // pred_check_branch
              %539 = sbr.rel target = $region101
            $region100: #{tpu_custom_call.1} parent=96 // pred_region
              // Predicated region
              $region113: #{tpu_custom_call.1} parent=100 // pred_check
                _
              $region114: #{tpu_custom_call.1} parent=100 // pred_check_branch
                %560 = sbr.rel (0) target = $region116
              $region115: #{tpu_custom_call.1} parent=100 // pred_region
                loop: start=0, step=1, limit=1
                $region117: #{tpu_custom_call.1} parent=115 // loop_pre_header
                  _
                $region118: #{tpu_custom_call.1} parent=115 // loop_header
                  %s562 = sphi 0, %s566
                  %p563 = scmp.ge.s32.totalorder %s562, 1
                  %s567 = sphi %s470, %s470
                  %s568 = sphi %s535, %s535
                $region119: #{tpu_custom_call.1} parent=115 // loop_header_branch
                  %565 = sbr.rel (%p563) target = $region123
                $region120: #{tpu_custom_call.1} parent=115 // loop_body
                  _
                $region121: #{tpu_custom_call.1} parent=115 // loop_footer
                  %s566 = sadd.s32 1, %s562
                $region122: #{tpu_custom_call.1} parent=115 // loop_footer_branch
                  %561 = sbr.rel target = $region118
                $region123: #{tpu_custom_call.1} parent=115 // loop_exit
                  _
                loop: start=0, step=1, limit=1
                $region124: #{tpu_custom_call.1} parent=115 // loop_pre_header
                  _
                $region125: #{tpu_custom_call.1} parent=115 // loop_header
                  %s571 = sphi 0, %s575
                  %p572 = scmp.ge.s32.totalorder %s571, 1
                  %s576 = sphi %s470, %s470
                  %s577 = sphi %s535, %s535
                $region126: #{tpu_custom_call.1} parent=115 // loop_header_branch
                  %574 = sbr.rel (%p572) target = $region130
                $region127: #{tpu_custom_call.1} parent=115 // loop_body
                  %v578 = vld [vmem:[%s576] sm:$0xf]
                  %579 = vst [vmem:[%s577] sm:$0xf] %v578
                  %v580 = vld [vmem:[%s576 + $0x4] sm:$0xf]
                  %581 = vst [vmem:[%s577 + $0xc] sm:$0xf] %v580
                  %v582 = vld [vmem:[%s576 + $0x8] sm:$0xf]
                  %583 = vst [vmem:[%s577 + $0x18] sm:$0xf] %v582
                  %v584 = vld [vmem:[%s576 + $0xc] sm:$0xf]
                  %585 = vst [vmem:[%s577 + $0x24] sm:$0xf] %v584
                $region128: #{tpu_custom_call.1} parent=115 // loop_footer
                  %s575 = sadd.s32 1, %s571
                $region129: #{tpu_custom_call.1} parent=115 // loop_footer_branch
                  %570 = sbr.rel target = $region125
                $region130: #{tpu_custom_call.1} parent=115 // loop_exit
                  _
              $region116: #{tpu_custom_call.1} parent=100 // pred_fallthru
                _
            $region101: #{tpu_custom_call.1} parent=96 // pred_fallthru
              _
            // Predicated region
            $region102: #{tpu_custom_call.1} parent=96 // pred_check
              _
            $region103: #{tpu_custom_call.1} parent=96 // pred_check_branch
              %541 = sbr.rel (0) target = $region105
            $region104: #{tpu_custom_call.1} parent=96 // pred_region
              loop: start=0, step=1, limit=1
              $region106: #{tpu_custom_call.1} parent=104 // loop_pre_header
                _
              $region107: #{tpu_custom_call.1} parent=104 // loop_header
                %s544 = sphi 0, %s548
                %p545 = scmp.ge.s32.totalorder %s544, 1
                %s549 = sphi %s470, %s470
                %s550 = sphi %s535, %s535
              $region108: #{tpu_custom_call.1} parent=104 // loop_header_branch
                %547 = sbr.rel (%p545) target = $region112
              $region109: #{tpu_custom_call.1} parent=104 // loop_body
                %v551 = vld [vmem:[%s549] sm:$0xf]
                %552 = vst [vmem:[%s550] sm:$0xf] %v551
                %v553 = vld [vmem:[%s549 + $0x4] sm:$0xf]
                %554 = vst [vmem:[%s550 + $0xc] sm:$0xf] %v553
                %v555 = vld [vmem:[%s549 + $0x8] sm:$0xf]
                %556 = vst [vmem:[%s550 + $0x18] sm:$0xf] %v555
                %v557 = vld [vmem:[%s549 + $0xc] sm:$0xf]
                %558 = vst [vmem:[%s550 + $0x24] sm:$0xf] %v557
              $region110: #{tpu_custom_call.1} parent=104 // loop_footer
                %s548 = sadd.s32 1, %s544
              $region111: #{tpu_custom_call.1} parent=104 // loop_footer_branch
                %543 = sbr.rel target = $region107
              $region112: #{tpu_custom_call.1} parent=104 // loop_exit
                _
            $region105: #{tpu_custom_call.1} parent=96 // pred_fallthru
              _
          $region97: #{tpu_custom_call.1} parent=92 // pred_fallthru
            _
          %586 = vnop
        $region93: #{tpu_custom_call.1} parent=39 // pred_fallthru
          _
      $region40: #{tpu_custom_call.1} parent=5 // pred_fallthru
        _
      %p587 = scmp.le.s32.totalorder 2, %s17
      // Predicated region
      $region131: #{tpu_custom_call.1} parent=5 // pred_check
        %p588 = pneg %p587
      $region132: #{tpu_custom_call.1} parent=5 // pred_check_branch
        %590 = sbr.rel (%p588) target = $region134
      $region133: #{tpu_custom_call.1} parent=5 // pred_region
        %s591 = ssub.s32 %s17, 2
        // Predicated region
        $region135: #{tpu_custom_call.1} parent=133 // pred_check
          %p592 = pneg %p172
        $region136: #{tpu_custom_call.1} parent=133 // pred_check_branch
          %594 = sbr.rel (%p592) target = $region138
        $region137: #{tpu_custom_call.1} parent=133 // pred_region
          %s595 = sand.u32 %s157, 1
          %s596 = sand.u32 %s157, 1
          %s597 = smul.addr %s596, 16
          %s598 = scalar_lea.vmem [#allocation6], %s597
        $region138: #{tpu_custom_call.1} parent=133 // pred_fallthru
          _
        // Predicated region
        $region139: #{tpu_custom_call.1} parent=133 // pred_check
          %p599 = pneg %p200
        $region140: #{tpu_custom_call.1} parent=133 // pred_check_branch
          %601 = sbr.rel (%p599) target = $region142
        $region141: #{tpu_custom_call.1} parent=133 // pred_region
          %s602 = sand.u32 %s185, 1
          %s603 = sand.u32 %s185, 1
          %s604 = smul.addr %s603, 16
          %s605 = scalar_lea.vmem [#allocation7], %s604
        $region142: #{tpu_custom_call.1} parent=133 // pred_fallthru
          _
      $region134: #{tpu_custom_call.1} parent=5 // pred_fallthru
        _
    $region6: #{tpu_custom_call.1} parent=1 // loop_footer
      %s21 = sadd.s32 1, %s17
    $region7: #{tpu_custom_call.1} parent=1 // loop_footer_branch
      %16 = sbr.rel target = $region3
    $region8: #{tpu_custom_call.1} parent=1 // loop_exit
      _
    %606 = vsyncpa [#allocation3], 1
    %s607 = scalar_lea.sflag [#allocation3], 1
    %608 = vsyncpa %s607, 1
    %609 = vsyncpa [#allocation5], 1

</llo_original>
